<compile_context>
chip_gen: v7x
topology: tpu7x:2x2x1
jax: 0.10.0
libtpu: 0.0.40
codegen_flags: <defaults>
</compile_context>

<pallas_src>
import jax
import jax.numpy as jnp
from jax.experimental import pallas as pl
from jax.experimental.pallas import tpu as pltpu

EPS = 1e-3      # BatchNorm2d eps
LANES = 128


def _round_up(x, m):
    return (x + m - 1) // m * m


# ---------------------------------------------------------------------------
# Pass 1: SE fold + 1x1 conv (MXU matmul) + BN statistics accumulation
# ---------------------------------------------------------------------------
def se_conv_stats_kernel(x63_ref, w1_ref, b1_ref, x_ref, w2_ref,
                         y_ref, sum_ref, ssq_ref, w2s_ref):
    b = pl.program_id(0)   # batch element
    i = pl.program_id(1)   # row tile within the image

    @pl.when((b == 0) & (i == 0))
    def _init_stats():
        sum_ref[...] = jnp.zeros_like(sum_ref)
        ssq_ref[...] = jnp.zeros_like(ssq_ref)

    @pl.when(i == 0)
    def _fold_se_scale():
        # SE branch on the VPU (no MXU): s_col = sigmoid(W1 @ x63 + b1), shape [K_pad, 1]
        s_col = jax.nn.sigmoid(
            jnp.sum(w1_ref[...] * x63_ref[0], axis=1, keepdims=True) + b1_ref[...])
        # Fold the per-batch SE scale into the 1x1-conv weight (pure reassociation):
        #   (x * s) @ W2  ==  x @ (s_col * W2)
        w2s_ref[...] = w2_ref[...] * s_col

    # 1x1 conv as a lane-dense MXU matmul: [tile, 256] @ [256, 128] -> [tile, 128]
    y = jnp.dot(x_ref[0], w2s_ref[...], preferred_element_type=jnp.float32)
    y_ref[0] = y

    # Accumulate BN batch statistics (resident accumulator outputs).
    sum_ref[...] += jnp.sum(y, axis=0, keepdims=True)
    ssq_ref[...] += jnp.sum(y * y, axis=0, keepdims=True)


# ---------------------------------------------------------------------------
# Pass 2: apply precomputed BN scale/shift (fully parallel over row tiles)
# ---------------------------------------------------------------------------
def bn_apply_kernel(y_ref, scale_ref, shift_ref, out_ref):
    out_ref[...] = y_ref[...] * scale_ref[...] + shift_ref[...]


# ---------------------------------------------------------------------------
# Wrapper
# ---------------------------------------------------------------------------
def fused_forward(x63, x60, w1, b1, w2, gamma, beta, *, row_tile=512):
    """Forward of module M.

    x63:   [N, C_se, 1, 1]   SE input
    x60:   [N, C_mid, H, W]  activation to be scaled
    w1:    [C_mid, C_se]     conv2d21 weight (1x1);  b1: [C_mid] bias
    w2:    [C_out, C_mid]    conv2d22 weight (1x1), no bias
    gamma, beta: [C_out]     BatchNorm2d affine parameters
    returns [N, C_out, H, W] (float32)
    """
    assert row_tile % 8 == 0
    f32 = jnp.float32
    N, C_mid, H, W = x60.shape
    C_se = x63.shape[1]
    C_out = w2.shape[0]

    # Lane-dense padded dims: unmasked vector loads/stores + full MXU tiles.
    k_pad = _round_up(C_mid, LANES)          # 240 -> 256 (contraction dim)
    n_pad = _round_up(C_out, LANES)          # 40  -> 128 (output dim)

    hw = H * W
    hw_pad = _round_up(hw, row_tile)
    tiles_per_image = hw_pad // row_tile

    # ---- layout plumbing (channels-last rows, zero padded) -------------------
    x_slab = jnp.transpose(x60.astype(f32), (0, 2, 3, 1)).reshape(N, hw, C_mid)
    x_slab = jnp.pad(x_slab, ((0, 0), (0, hw_pad - hw), (0, k_pad - C_mid)))

    x63_3d = x63.astype(f32).reshape(N, 1, C_se)                             # [N,1,10]
    w1_p = jnp.pad(w1.astype(f32), ((0, k_pad - C_mid), (0, 0)))             # [256,10]
    b1_p = jnp.pad(b1.astype(f32).reshape(C_mid, 1),
                   ((0, k_pad - C_mid), (0, 0)))                             # [256,1]
    w2_p = jnp.pad(w2.astype(f32).T,
                   ((0, k_pad - C_mid), (0, n_pad - C_out)))                 # [256,128]
    gamma_p = jnp.pad(gamma.astype(f32), (0, n_pad - C_out)).reshape(1, n_pad)
    beta_p = jnp.pad(beta.astype(f32), (0, n_pad - C_out)).reshape(1, n_pad)

    # ---- pass 1: SE fold + matmul + BN statistics -----------------------------
    y_pad, ssum, ssq = pl.pallas_call(
        se_conv_stats_kernel,
        grid=(N, tiles_per_image),
        in_specs=[
            pl.BlockSpec((1, 1, C_se), lambda b, i: (b, 0, 0)),       # x63 (per batch)
            pl.BlockSpec((k_pad, C_se), lambda b, i: (0, 0)),         # W1
            pl.BlockSpec((k_pad, 1), lambda b, i: (0, 0)),            # b1
            pl.BlockSpec((1, row_tile, k_pad), lambda b, i: (b, i, 0)),  # x rows
            pl.BlockSpec((k_pad, n_pad), lambda b, i: (0, 0)),        # W2
        ],
        out_specs=[
            pl.BlockSpec((1, row_tile, n_pad), lambda b, i: (b, i, 0)),  # y (unnormalized)
            pl.BlockSpec((1, n_pad), lambda b, i: (0, 0)),            # sum  (accumulator)
            pl.BlockSpec((1, n_pad), lambda b, i: (0, 0)),            # sumsq(accumulator)
        ],
        out_shape=[
            jax.ShapeDtypeStruct((N, hw_pad, n_pad), f32),
            jax.ShapeDtypeStruct((1, n_pad), f32),
            jax.ShapeDtypeStruct((1, n_pad), f32),
        ],
        scratch_shapes=[pltpu.VMEM((k_pad, n_pad), f32)],             # SE-scaled W2
        compiler_params=pltpu.CompilerParams(
            dimension_semantics=("arbitrary", "arbitrary")),
    )(x63_3d, w1_p, b1_p, x_slab, w2_p)

    # ---- tiny BN statistic math ([1,128]) in plain JAX -------------------------
    n_elems = jnp.asarray(N * hw, f32)      # padded rows are all-zero -> sums unaffected
    mean = ssum / n_elems
    var = jnp.maximum(ssq / n_elems - mean * mean, 0.0)
    inv = jax.lax.rsqrt(var + EPS)
    scale = gamma_p * inv                                    # [1, 128]
    shift = beta_p - mean * scale                            # [1, 128]

    # ---- pass 2: normalize (row tiled, parallel) -------------------------------
    y2d = y_pad.reshape(N * hw_pad, n_pad)
    out2d = pl.pallas_call(
        bn_apply_kernel,
        grid=(N * hw_pad // row_tile,),
        in_specs=[
            pl.BlockSpec((row_tile, n_pad), lambda i: (i, 0)),
            pl.BlockSpec((1, n_pad), lambda i: (0, 0)),
            pl.BlockSpec((1, n_pad), lambda i: (0, 0)),
        ],
        out_specs=pl.BlockSpec((row_tile, n_pad), lambda i: (i, 0)),
        out_shape=jax.ShapeDtypeStruct((N * hw_pad, n_pad), f32),
        compiler_params=pltpu.CompilerParams(
            dimension_semantics=("parallel",)),
    )(y2d, scale, shift)

    # ---- strip padding, back to NCHW -------------------------------------------
    out = out2d.reshape(N, hw_pad, n_pad)[:, :hw, :C_out]
    out = jnp.transpose(out.reshape(N, H, W, C_out), (0, 3, 1, 2))
    return out


if __name__ == "__main__":
    # Small shapes consistent with the module's fixed channels (10 -> 240 -> 40),
    # reduced spatial extent (16x16 instead of 56x56), batch 2.
    N, C_SE, C_MID, C_OUT, H, W = 2, 10, 240, 40, 16, 16

    key = jax.random.PRNGKey(0)
    ks = jax.random.split(key, 7)

    x60 = jax.random.normal(ks[0], (N, C_MID, H, W), jnp.float32)       # activation
    x63 = jax.random.normal(ks[1], (N, C_SE, 1, 1), jnp.float32)        # SE input

    w1 = jax.random.normal(ks[2], (C_MID, C_SE), jnp.float32) * 0.1     # conv2d21.weight
    b1 = jax.random.normal(ks[3], (C_MID,), jnp.float32) * 0.1          # conv2d21.bias
    w2 = jax.random.normal(ks[4], (C_OUT, C_MID), jnp.float32) * 0.05   # conv2d22.weight
    gamma = 1.0 + 0.1 * jax.random.normal(ks[5], (C_OUT,), jnp.float32)  # bn.weight
    beta = 0.1 * jax.random.normal(ks[6], (C_OUT,), jnp.float32)         # bn.bias

    out = fused_forward(x63, x60, w1, b1, w2, gamma, beta, row_tile=128)
    out = jax.block_until_ready(out)

    # ---- plain-JAX reference (original op order, training-mode BN) -------------
    x63_2d = x63.reshape(N, C_SE)
    s_ref = jax.nn.sigmoid(
        jnp.einsum("ns,ms->nm", x63_2d, w1, precision="highest") + b1[None, :])  # [N,240]
    x66 = x60 * s_ref.reshape(N, C_MID, 1, 1)
    x67 = jnp.einsum("nchw,oc->nohw", x66, w2, precision="highest")              # [N,40,H,W]
    mean = x67.mean(axis=(0, 2, 3), keepdims=True)
    var = ((x67 - mean) ** 2).mean(axis=(0, 2, 3), keepdims=True)
    ref = (x67 - mean) * jax.lax.rsqrt(var + EPS) * gamma.reshape(1, C_OUT, 1, 1) \
          + beta.reshape(1, C_OUT, 1, 1)

    assert out.shape == (N, C_OUT, H, W), out.shape
    max_err = float(jnp.max(jnp.abs(out - ref)))
    assert jnp.allclose(out, ref, atol=1e-3, rtol=1e-3), f"mismatch vs reference, max_err={max_err}"
    print("KERNEL_OK")
</pallas_src>

<mosaic_0001>
module attributes {stable_mosaic.version = 11 : i64} {
  func.func @se_conv_stats_kernel(%arg0: i32, %arg1: i32, %arg2: memref<1x1x10xf32, #tpu.memory_space<vmem>>, %arg3: memref<256x10xf32, #tpu.memory_space<vmem>>, %arg4: memref<256x1xf32, #tpu.memory_space<vmem>>, %arg5: memref<1x128x256xf32, #tpu.memory_space<vmem>>, %arg6: memref<256x128xf32, #tpu.memory_space<vmem>>, %arg7: memref<1x128x128xf32, #tpu.memory_space<vmem>>, %arg8: memref<1x128xf32, #tpu.memory_space<vmem>>, %arg9: memref<1x128xf32, #tpu.memory_space<vmem>>, %arg10: memref<256x128xf32, #tpu.memory_space<vmem>>) attributes {dimension_semantics = [#tpu.dimension_semantics<arbitrary>, #tpu.dimension_semantics<arbitrary>], iteration_bounds = array<i64: 2, 2>, scalar_prefetch = 0 : i64, scratch_operands = 1 : i64, tpu.core_type = #tpu.core_type<tc>, window_params = [{transform_indices = @transform_0, window_bounds = array<i64: 1, 1, 10>}, {pipeline_mode = #tpu.pipeline_mode<synchronous>, transform_indices = @transform_1, window_bounds = array<i64: 256, 10>}, {pipeline_mode = #tpu.pipeline_mode<synchronous>, transform_indices = @transform_2, window_bounds = array<i64: 256, 1>}, {transform_indices = @transform_3, window_bounds = array<i64: 1, 128, 256>}, {pipeline_mode = #tpu.pipeline_mode<synchronous>, transform_indices = @transform_4, window_bounds = array<i64: 256, 128>}, {transform_indices = @transform_5, window_bounds = array<i64: 1, 128, 128>}, {pipeline_mode = #tpu.pipeline_mode<synchronous>, transform_indices = @transform_6, window_bounds = array<i64: 1, 128>}, {pipeline_mode = #tpu.pipeline_mode<synchronous>, transform_indices = @transform_7, window_bounds = array<i64: 1, 128>}]} {
    %c0_i32 = arith.constant 0 : i32
    %0 = arith.cmpi eq, %arg0, %c0_i32 : i32
    %c0_i32_0 = arith.constant 0 : i32
    %1 = arith.cmpi eq, %arg1, %c0_i32_0 : i32
    %2 = arith.andi %0, %1 : i1
    %3 = arith.extui %2 : i1 to i32
    %c0_i32_1 = arith.constant 0 : i32
    %4 = arith.cmpi ne, %3, %c0_i32_1 : i32
    scf.if %4 {
      %cst_21 = arith.constant 0.000000e+00 : f32
      %26 = vector.broadcast %cst_21 : f32 to vector<1x128xf32>
      %c0_22 = arith.constant 0 : index
      %c0_23 = arith.constant 0 : index
      %27 = vector.load %arg8[%c0_22, %c0_23] : memref<1x128xf32, #tpu.memory_space<vmem>>, vector<1x128xf32>
      tpu.vector_store %arg8[%c0_22, %c0_23], %26 {strides = array<i32>} : memref<1x128xf32, #tpu.memory_space<vmem>>, vector<1x128xf32>,
      %cst_24 = arith.constant 0.000000e+00 : f32
      %28 = vector.broadcast %cst_24 : f32 to vector<1x128xf32>
      %c0_25 = arith.constant 0 : index
      %c0_26 = arith.constant 0 : index
      %29 = vector.load %arg9[%c0_25, %c0_26] : memref<1x128xf32, #tpu.memory_space<vmem>>, vector<1x128xf32>
      tpu.vector_store %arg9[%c0_25, %c0_26], %28 {strides = array<i32>} : memref<1x128xf32, #tpu.memory_space<vmem>>, vector<1x128xf32>,
    } else {
    }
    %c0_i32_2 = arith.constant 0 : i32
    %5 = arith.cmpi eq, %arg1, %c0_i32_2 : i32
    %6 = arith.extui %5 : i1 to i32
    %c0_i32_3 = arith.constant 0 : i32
    %7 = arith.cmpi ne, %6, %c0_i32_3 : i32
    scf.if %7 {
      %c0_21 = arith.constant 0 : index
      %c0_22 = arith.constant 0 : index
      %26 = vector.load %arg3[%c0_21, %c0_22] : memref<256x10xf32, #tpu.memory_space<vmem>>, vector<256x10xf32>
      %c0_23 = arith.constant 0 : index
      %c0_24 = arith.constant 0 : index
      %c0_25 = arith.constant 0 : index
      %27 = vector.load %arg2[%c0_23, %c0_24, %c0_25] : memref<1x1x10xf32, #tpu.memory_space<vmem>>, vector<1x1x10xf32>
      %28 = vector.shape_cast %27 : vector<1x1x10xf32> to vector<1x10xf32>
      %29 = vector.broadcast %28 : vector<1x10xf32> to vector<256x10xf32>
      %30 = arith.mulf %26, %29 : vector<256x10xf32>
      %cst_26 = arith.constant dense<0.000000e+00> : vector<256xf32>
      %31 = vector.multi_reduction <add>, %30, %cst_26 [1] : vector<256x10xf32> to vector<256xf32>
      %32 = vector.shape_cast %31 : vector<256xf32> to vector<256x1xf32>
      %c0_27 = arith.constant 0 : index
      %c0_28 = arith.constant 0 : index
      %33 = vector.load %arg4[%c0_27, %c0_28] : memref<256x1xf32, #tpu.memory_space<vmem>>, vector<256x1xf32>
      %34 = arith.addf %32, %33 : vector<256x1xf32>
      %35 = arith.negf %34 : vector<256x1xf32>
      %36 = math.exp %35 : vector<256x1xf32>
      %cst_29 = arith.constant 1.000000e+00 : f32
      %37 = vector.broadcast %cst_29 : f32 to vector<256x1xf32>
      %38 = arith.addf %37, %36 : vector<256x1xf32>
      %39 = arith.divf %37, %38 : vector<256x1xf32>
      %c0_30 = arith.constant 0 : index
      %c0_31 = arith.constant 0 : index
      %40 = vector.load %arg6[%c0_30, %c0_31] : memref<256x128xf32, #tpu.memory_space<vmem>>, vector<256x128xf32>
      %41 = vector.broadcast %39 : vector<256x1xf32> to vector<256x128xf32>
      %42 = arith.mulf %40, %41 : vector<256x128xf32>
      %c0_32 = arith.constant 0 : index
      %c0_33 = arith.constant 0 : index
      %43 = vector.load %arg10[%c0_32, %c0_33] : memref<256x128xf32, #tpu.memory_space<vmem>>, vector<256x128xf32>
      tpu.vector_store %arg10[%c0_32, %c0_33], %42 {strides = array<i32>} : memref<256x128xf32, #tpu.memory_space<vmem>>, vector<256x128xf32>,
    } else {
    }
    %c0 = arith.constant 0 : index
    %c0_4 = arith.constant 0 : index
    %c0_5 = arith.constant 0 : index
    %8 = vector.load %arg5[%c0, %c0_4, %c0_5] : memref<1x128x256xf32, #tpu.memory_space<vmem>>, vector<1x128x256xf32>
    %9 = vector.shape_cast %8 : vector<1x128x256xf32> to vector<128x256xf32>
    %c0_6 = arith.constant 0 : index
    %c0_7 = arith.constant 0 : index
    %10 = vector.load %arg10[%c0_6, %c0_7] : memref<256x128xf32, #tpu.memory_space<vmem>>, vector<256x128xf32>
    %cst = arith.constant dense<0.000000e+00> : vector<128x128xf32>
    %11 = tpu.matmul %9, %10, %cst {dimension_numbers = #tpu.dot_dimension_numbers<[1], [0], [0], [1], [0, 0, 1, 1], [], []>} : vector<128x256xf32>, vector<256x128xf32>, vector<128x128xf32> -> vector<128x128xf32>
    %c0_8 = arith.constant 0 : index
    %c0_9 = arith.constant 0 : index
    %c0_10 = arith.constant 0 : index
    %12 = vector.load %arg7[%c0_8, %c0_9, %c0_10] : memref<1x128x128xf32, #tpu.memory_space<vmem>>, vector<1x128x128xf32>
    %13 = vector.shape_cast %12 : vector<1x128x128xf32> to vector<128x128xf32>
    %14 = vector.shape_cast %11 : vector<128x128xf32> to vector<1x128x128xf32>
    tpu.vector_store %arg7[%c0_8, %c0_9, %c0_10], %14 {strides = array<i32>} : memref<1x128x128xf32, #tpu.memory_space<vmem>>, vector<1x128x128xf32>,
    %c0_11 = arith.constant 0 : index
    %c0_12 = arith.constant 0 : index
    %15 = vector.load %arg8[%c0_11, %c0_12] : memref<1x128xf32, #tpu.memory_space<vmem>>, vector<1x128xf32>
    %cst_13 = arith.constant dense<0.000000e+00> : vector<128xf32>
    %16 = vector.multi_reduction <add>, %11, %cst_13 [0] : vector<128x128xf32> to vector<128xf32>
    %17 = vector.shape_cast %16 : vector<128xf32> to vector<1x128xf32>
    %18 = arith.addf %15, %17 : vector<1x128xf32>
    %c0_14 = arith.constant 0 : index
    %c0_15 = arith.constant 0 : index
    %19 = vector.load %arg8[%c0_14, %c0_15] : memref<1x128xf32, #tpu.memory_space<vmem>>, vector<1x128xf32>
    tpu.vector_store %arg8[%c0_14, %c0_15], %18 {strides = array<i32>} : memref<1x128xf32, #tpu.memory_space<vmem>>, vector<1x128xf32>,
    %c0_16 = arith.constant 0 : index
    %c0_17 = arith.constant 0 : index
    %20 = vector.load %arg9[%c0_16, %c0_17] : memref<1x128xf32, #tpu.memory_space<vmem>>, vector<1x128xf32>
    %21 = arith.mulf %11, %11 : vector<128x128xf32>
    %cst_18 = arith.constant dense<0.000000e+00> : vector<128xf32>
    %22 = vector.multi_reduction <add>, %21, %cst_18 [0] : vector<128x128xf32> to vector<128xf32>
    %23 = vector.shape_cast %22 : vector<128xf32> to vector<1x128xf32>
    %24 = arith.addf %20, %23 : vector<1x128xf32>
    %c0_19 = arith.constant 0 : index
    %c0_20 = arith.constant 0 : index
    %25 = vector.load %arg9[%c0_19, %c0_20] : memref<1x128xf32, #tpu.memory_space<vmem>>, vector<1x128xf32>
    tpu.vector_store %arg9[%c0_19, %c0_20], %24 {strides = array<i32>} : memref<1x128xf32, #tpu.memory_space<vmem>>, vector<1x128xf32>,
    return
  }
  func.func @transform_0(%arg0: i32, %arg1: i32) -> (i32, i32, i32) {
    %c0_i32 = arith.constant 0 : i32
    %c0_i32_0 = arith.constant 0 : i32
    %c0_i32_1 = arith.constant 0 : i32
    return %arg0, %c0_i32, %c0_i32_0 : i32, i32, i32
  }
  func.func @transform_1(%arg0: i32, %arg1: i32) -> (i32, i32) {
    %c0_i32 = arith.constant 0 : i32
    %c0_i32_0 = arith.constant 0 : i32
    %c0_i32_1 = arith.constant 0 : i32
    return %c0_i32, %c0_i32_0 : i32, i32
  }
  func.func @transform_2(%arg0: i32, %arg1: i32) -> (i32, i32) {
    %c0_i32 = arith.constant 0 : i32
    %c0_i32_0 = arith.constant 0 : i32
    %c0_i32_1 = arith.constant 0 : i32
    return %c0_i32, %c0_i32_0 : i32, i32
  }
  func.func @transform_3(%arg0: i32, %arg1: i32) -> (i32, i32, i32) {
    %c0_i32 = arith.constant 0 : i32
    %c0_i32_0 = arith.constant 0 : i32
    return %arg0, %arg1, %c0_i32 : i32, i32, i32
  }
  func.func @transform_4(%arg0: i32, %arg1: i32) -> (i32, i32) {
    %c0_i32 = arith.constant 0 : i32
    %c0_i32_0 = arith.constant 0 : i32
    %c0_i32_1 = arith.constant 0 : i32
    return %c0_i32, %c0_i32_0 : i32, i32
  }
  func.func @transform_5(%arg0: i32, %arg1: i32) -> (i32, i32, i32) {
    %c0_i32 = arith.constant 0 : i32
    %c0_i32_0 = arith.constant 0 : i32
    return %arg0, %arg1, %c0_i32 : i32, i32, i32
  }
  func.func @transform_6(%arg0: i32, %arg1: i32) -> (i32, i32) {
    %c0_i32 = arith.constant 0 : i32
    %c0_i32_0 = arith.constant 0 : i32
    %c0_i32_1 = arith.constant 0 : i32
    return %c0_i32, %c0_i32_0 : i32, i32
  }
  func.func @transform_7(%arg0: i32, %arg1: i32) -> (i32, i32) {
    %c0_i32 = arith.constant 0 : i32
    %c0_i32_0 = arith.constant 0 : i32
    %c0_i32_1 = arith.constant 0 : i32
    return %c0_i32, %c0_i32_0 : i32, i32
  }
}

</mosaic_0001>

<llo_original>
// kernel: tpu_custom_call.1
$region0: #{tpu_custom_call.1}
  #allocation0 [shape = 'u32[]', space=smem, size = 0x4, offset = 0x4, fixed_abs, tag = 'smem constant byte address 0x4 - core index']
  #allocation1 [shape = 'u32[144,128]{1,0:T(1,128)}', space=vmem, size = 0x12000, scoped, tag = 'internal scratch']
  #allocation2 [shape = 'f32[256,128]{1,0:T(8,128)}', space=vmem, size = 0x20000, scoped, tag = 'scratch operand']
  %s0 = inlined_call_operand.vmem [shape: f32[2,1,10], index: 0, kind: input, shape index: {}]
  %s1 = inlined_call_operand.vmem [shape: f32[256,10], index: 1, kind: input, shape index: {}]
  %s2 = inlined_call_operand.vmem [shape: f32[256,1], index: 2, kind: input, shape index: {}]
  %s3 = inlined_call_operand.hbm [shape: f32[2,256,256], index: 3, kind: input, shape index: {}]
  %s4 = inlined_call_operand.vmem [shape: f32[256,128], index: 4, kind: input, shape index: {}]
  %s5 = inlined_call_operand.hbm [shape: f32[2,256,128], index: 5, kind: output, shape index: {0}]
  %s6 = inlined_call_operand.hbm [shape: f32[1,128], index: 6, kind: output, shape index: {1}]
  %s7 = inlined_call_operand.hbm [shape: f32[1,128], index: 7, kind: output, shape index: {2}]
  %8 = xla_tuple %s5, %s6, %s7
  %s9 = sld [smem:[#allocation0]]
  $region81: #{tpu_custom_call.1} parent=0
    _
  %s11 = ssub.s32 1, %s9
  %s12 = scalar_select 0, %s11, %s9
  $region1: #{tpu_custom_call.1} parent=0
    #allocation3 [shape = 'u8[262144]{0}', space=vmem, size = 0x40000, scoped, tag = 'input window, operand 3']
    #allocation4 [shape = 's32[2]{0}', space=sflag, size = 0x8, scoped, tag = 'scoped memory for tpu_custom_call.1']
    #allocation5 [shape = 's32[2]{0}', space=sflag, size = 0x8, scoped, tag = 'scoped memory for tpu_custom_call.1']
    #allocation6 [shape = 'u8[131072]{0}', space=vmem, size = 0x20000, scoped, tag = 'output window, operand 0']
    #allocation7 [shape = 'u8[512]{0}', space=vmem, size = 0x400, scoped, tag = 'output window, operand 1, single buffered']
    #allocation8 [shape = 's32[1]{0}', space=sflag, size = 0x4, scoped, tag = 'scoped memory for tpu_custom_call.1']
    #allocation9 [shape = 'u8[512]{0}', space=vmem, size = 0x400, scoped, tag = 'output window, operand 2, single buffered']
    %13 = vsyncpa [#allocation4], 0
    %s14 = scalar_lea.sflag [#allocation4], 1
    %15 = vsyncpa %s14, 0
    %16 = vsyncpa [#allocation5], 0
    %s17 = scalar_lea.sflag [#allocation5], 1
    %18 = vsyncpa %s17, 0
    %19 = vsyncpa [#allocation8], 0
    loop: start=0, step=1, limit=6
    $region2: #{tpu_custom_call.1} parent=1 // loop_pre_header
      _
    $region3: #{tpu_custom_call.1} parent=1 // loop_header
      %s21 = sphi 0, %s25
      %p22 = scmp.ge.s32.totalorder %s21, 6
      %s28 = sphi 0, %s40
      %s29 = sphi 0, %s36
      %s30 = sphi 0, %s28
      %s31 = sphi 0, %s29
      %s32 = sphi 0, %s30
      %s33 = sphi 0, %s31
      %s43 = sphi 0, %s45
      %s46 = sphi 0, %s43
      %s47 = sphi 0, %s46
      %s63 = sphi 0, %s47
      %s67 = sphi 0, %s67
      %s69 = sphi 0, %s67
      %s70 = sphi 0, %s69
      %s84 = sphi 0, %s70
      %s88 = sphi 0, %s88
      %s90 = sphi 0, %s88
      %s91 = sphi 0, %s90
      %s105 = sphi 0, %s91
      %s113 = sphi 0, %s115
      %s116 = sphi 0, %s113
      %s117 = sphi 0, %s116
      %s133 = sphi 0, %s117
      %s137 = sphi 0, %s137
      %s139 = sphi 0, %s137
      %s140 = sphi 0, %s139
      %s154 = sphi 0, %s140
      %s162 = sphi 0, %s164
      %s165 = sphi 0, %s162
      %s166 = sphi 0, %s165
      %s182 = sphi 0, %s166
      %s186 = sphi 0, %s186
      %s188 = sphi 0, %s186
      %s189 = sphi 0, %s188
      %s203 = sphi 0, %s189
      %s207 = sphi 0, %s207
      %s209 = sphi 0, %s207
      %s210 = sphi 0, %s209
      %s224 = sphi 0, %s210
    $region4: #{tpu_custom_call.1} parent=1 // loop_header_branch
      %24 = sbr.rel (%p22) target = $region8
    $region5: #{tpu_custom_call.1} parent=1 // loop_body
      %s26 = ssub.s32 %s21, 1
      %s27 = ssub.s32 %s21, 2
      %s34 = sadd.s32 1, %s29
      %p35 = scmp.ge.s32.totalorder %s34, 2
      %s36 = scalar_select %p35, 0, %s34
      %s37 = sadd.s32 1, %s28
      %s38 = scalar_select %p35, %s37, %s28
      %p39 = scmp.ge.s32.totalorder %s38, 2
      %s40 = scalar_select %p39, 0, %s38
      %s41 = ssub.s32 %s28, %s40
      %p42 = scmp.eq.s32.totalorder %s41, 0
      %s44 = sadd.s32 %s43, 1
      %s45 = scalar_select %p42, %s43, %s44
      %p48 = pneg %p42
      %p49 = scmp.eq.s32.totalorder %s21, 3
      %p50 = por %p48, %p49
      %p51 = scmp.ne.s32.totalorder %s43, %s46
      %p52 = scmp.eq.s32.totalorder %s21, 0
      %p53 = por %p51, %p52
      %p54 = scmp.ne.s32.totalorder %s43, %s46
      %p55 = scmp.eq.s32.totalorder %s26, 3
      %p56 = por %p54, %p55
      %p57 = scmp.ne.s32.totalorder %s46, %s47
      %p58 = scmp.eq.s32.totalorder %s26, 0
      %p59 = por %p57, %p58
      %p60 = scmp.ne.s32.totalorder %s46, %s47
      %p61 = scmp.eq.s32.totalorder %s27, 3
      %p62 = por %p60, %p61
      %p64 = scmp.ne.s32.totalorder %s47, %s63
      %p65 = scmp.eq.s32.totalorder %s27, 0
      %p66 = por %p64, %p65
      %s68 = sadd.s32 %s67, 1
      %p71 = scmp.eq.s32.totalorder %s21, 3
      %p72 = scmp.ne.s32.totalorder %s67, %s69
      %p73 = scmp.eq.s32.totalorder %s21, 0
      %p74 = por %p72, %p73
      %p75 = scmp.ne.s32.totalorder %s67, %s69
      %p76 = scmp.eq.s32.totalorder %s26, 3
      %p77 = por %p75, %p76
      %p78 = scmp.ne.s32.totalorder %s69, %s70
      %p79 = scmp.eq.s32.totalorder %s26, 0
      %p80 = por %p78, %p79
      %p81 = scmp.ne.s32.totalorder %s69, %s70
      %p82 = scmp.eq.s32.totalorder %s27, 3
      %p83 = por %p81, %p82
      %p85 = scmp.ne.s32.totalorder %s70, %s84
      %p86 = scmp.eq.s32.totalorder %s27, 0
      %p87 = por %p85, %p86
      %s89 = sadd.s32 %s88, 1
      %p92 = scmp.eq.s32.totalorder %s21, 3
      %p93 = scmp.ne.s32.totalorder %s88, %s90
      %p94 = scmp.eq.s32.totalorder %s21, 0
      %p95 = por %p93, %p94
      %p96 = scmp.ne.s32.totalorder %s88, %s90
      %p97 = scmp.eq.s32.totalorder %s26, 3
      %p98 = por %p96, %p97
      %p99 = scmp.ne.s32.totalorder %s90, %s91
      %p100 = scmp.eq.s32.totalorder %s26, 0
      %p101 = por %p99, %p100
      %p102 = scmp.ne.s32.totalorder %s90, %s91
      %p103 = scmp.eq.s32.totalorder %s27, 3
      %p104 = por %p102, %p103
      %p106 = scmp.ne.s32.totalorder %s91, %s105
      %p107 = scmp.eq.s32.totalorder %s27, 0
      %p108 = por %p106, %p107
      %s109 = ssub.s32 %s28, %s40
      %s110 = ssub.s32 %s29, %s36
      %s111 = sor.u32 %s109, %s110
      %p112 = scmp.eq.s32.totalorder %s111, 0
      %s114 = sadd.s32 %s113, 1
      %s115 = scalar_select %p112, %s113, %s114
      %p118 = pneg %p112
      %p119 = scmp.eq.s32.totalorder %s21, 3
      %p120 = por %p118, %p119
      %p121 = scmp.ne.s32.totalorder %s113, %s116
      %p122 = scmp.eq.s32.totalorder %s21, 0
      %p123 = por %p121, %p122
      %p124 = scmp.ne.s32.totalorder %s113, %s116
      %p125 = scmp.eq.s32.totalorder %s26, 3
      %p126 = por %p124, %p125
      %p127 = scmp.ne.s32.totalorder %s116, %s117
      %p128 = scmp.eq.s32.totalorder %s26, 0
      %p129 = por %p127, %p128
      %p130 = scmp.ne.s32.totalorder %s116, %s117
      %p131 = scmp.eq.s32.totalorder %s27, 3
      %p132 = por %p130, %p131
      %p134 = scmp.ne.s32.totalorder %s117, %s133
      %p135 = scmp.eq.s32.totalorder %s27, 0
      %p136 = por %p134, %p135
      %s138 = sadd.s32 %s137, 1
      %p141 = scmp.eq.s32.totalorder %s21, 3
      %p142 = scmp.ne.s32.totalorder %s137, %s139
      %p143 = scmp.eq.s32.totalorder %s21, 0
      %p144 = por %p142, %p143
      %p145 = scmp.ne.s32.totalorder %s137, %s139
      %p146 = scmp.eq.s32.totalorder %s26, 3
      %p147 = por %p145, %p146
      %p148 = scmp.ne.s32.totalorder %s139, %s140
      %p149 = scmp.eq.s32.totalorder %s26, 0
      %p150 = por %p148, %p149
      %p151 = scmp.ne.s32.totalorder %s139, %s140
      %p152 = scmp.eq.s32.totalorder %s27, 3
      %p153 = por %p151, %p152
      %p155 = scmp.ne.s32.totalorder %s140, %s154
      %p156 = scmp.eq.s32.totalorder %s27, 0
      %p157 = por %p155, %p156
      %s158 = ssub.s32 %s28, %s40
      %s159 = ssub.s32 %s29, %s36
      %s160 = sor.u32 %s158, %s159
      %p161 = scmp.eq.s32.totalorder %s160, 0
      %s163 = sadd.s32 %s162, 1
      %s164 = scalar_select %p161, %s162, %s163
      %p167 = pneg %p161
      %p168 = scmp.eq.s32.totalorder %s21, 3
      %p169 = por %p167, %p168
      %p170 = scmp.ne.s32.totalorder %s162, %s165
      %p171 = scmp.eq.s32.totalorder %s21, 0
      %p172 = por %p170, %p171
      %p173 = scmp.ne.s32.totalorder %s162, %s165
      %p174 = scmp.eq.s32.totalorder %s26, 3
      %p175 = por %p173, %p174
      %p176 = scmp.ne.s32.totalorder %s165, %s166
      %p177 = scmp.eq.s32.totalorder %s26, 0
      %p178 = por %p176, %p177
      %p179 = scmp.ne.s32.totalorder %s165, %s166
      %p180 = scmp.eq.s32.totalorder %s27, 3
      %p181 = por %p179, %p180
      %p183 = scmp.ne.s32.totalorder %s166, %s182
      %p184 = scmp.eq.s32.totalorder %s27, 0
      %p185 = por %p183, %p184
      %s187 = sadd.s32 %s186, 1
      %p190 = scmp.eq.s32.totalorder %s21, 3
      %p191 = scmp.ne.s32.totalorder %s186, %s188
      %p192 = scmp.eq.s32.totalorder %s21, 0
      %p193 = por %p191, %p192
      %p194 = scmp.ne.s32.totalorder %s186, %s188
      %p195 = scmp.eq.s32.totalorder %s26, 3
      %p196 = por %p194, %p195
      %p197 = scmp.ne.s32.totalorder %s188, %s189
      %p198 = scmp.eq.s32.totalorder %s26, 0
      %p199 = por %p197, %p198
      %p200 = scmp.ne.s32.totalorder %s188, %s189
      %p201 = scmp.eq.s32.totalorder %s27, 3
      %p202 = por %p200, %p201
      %p204 = scmp.ne.s32.totalorder %s189, %s203
      %p205 = scmp.eq.s32.totalorder %s27, 0
      %p206 = por %p204, %p205
      %s208 = sadd.s32 %s207, 1
      %p211 = scmp.eq.s32.totalorder %s21, 3
      %p212 = scmp.ne.s32.totalorder %s207, %s209
      %p213 = scmp.eq.s32.totalorder %s21, 0
      %p214 = por %p212, %p213
      %p215 = scmp.ne.s32.totalorder %s207, %s209
      %p216 = scmp.eq.s32.totalorder %s26, 3
      %p217 = por %p215, %p216
      %p218 = scmp.ne.s32.totalorder %s209, %s210
      %p219 = scmp.eq.s32.totalorder %s26, 0
      %p220 = por %p218, %p219
      %p221 = scmp.ne.s32.totalorder %s209, %s210
      %p222 = scmp.eq.s32.totalorder %s27, 3
      %p223 = por %p221, %p222
      %p225 = scmp.ne.s32.totalorder %s210, %s224
      %p226 = scmp.eq.s32.totalorder %s27, 0
      %p227 = por %p225, %p226
      %p228 = scmp.le.s32.totalorder 1, %s21
      %p229 = scmp.lt.s32.totalorder %s21, 5
      %p230 = pnand %p228, %p229
      %p231 = pneg %p230
      // Predicated region
      $region9: #{tpu_custom_call.1} parent=5 // pred_check
        _
      $region10: #{tpu_custom_call.1} parent=5 // pred_check_branch
        %233 = sbr.rel (%p230) target = $region12
      $region11: #{tpu_custom_call.1} parent=5 // pred_region
        %s234 = ssub.s32 %s21, 1
        // Predicated region
        $region13: #{tpu_custom_call.1} parent=11 // pred_check
          %p235 = pneg %p80
        $region14: #{tpu_custom_call.1} parent=11 // pred_check_branch
          %237 = sbr.rel (%p235) target = $region16
        $region15: #{tpu_custom_call.1} parent=11 // pred_region
          _
        $region16: #{tpu_custom_call.1} parent=11 // pred_fallthru
          _
        // Predicated region
        $region17: #{tpu_custom_call.1} parent=11 // pred_check
          %p238 = pneg %p101
        $region18: #{tpu_custom_call.1} parent=11 // pred_check_branch
          %240 = sbr.rel (%p238) target = $region20
        $region19: #{tpu_custom_call.1} parent=11 // pred_region
          _
        $region20: #{tpu_custom_call.1} parent=11 // pred_fallthru
          _
        // Predicated region
        $region21: #{tpu_custom_call.1} parent=11 // pred_check
          %p241 = pneg %p150
        $region22: #{tpu_custom_call.1} parent=11 // pred_check_branch
          %243 = sbr.rel (%p241) target = $region24
        $region23: #{tpu_custom_call.1} parent=11 // pred_region
          _
        $region24: #{tpu_custom_call.1} parent=11 // pred_fallthru
          _
      $region12: #{tpu_custom_call.1} parent=5 // pred_fallthru
        _
      %p244 = scmp.lt.s32.totalorder %s21, 4
      // Predicated region
      $region25: #{tpu_custom_call.1} parent=5 // pred_check
        %p245 = pneg %p244
      $region26: #{tpu_custom_call.1} parent=5 // pred_check_branch
        %247 = sbr.rel (%p245) target = $region28
      $region27: #{tpu_custom_call.1} parent=5 // pred_region
        // Predicated region
        $region29: #{tpu_custom_call.1} parent=27 // pred_check
          %p248 = pneg %p53
        $region30: #{tpu_custom_call.1} parent=27 // pred_check_branch
          %250 = sbr.rel (%p248) target = $region32
        $region31: #{tpu_custom_call.1} parent=27 // pred_region
          %p251 = scmp.lt.s32.totalorder %s28, 1
          %s252 = scalar_select %p251, %s28, 1
          %s253 = scalar_lea.vmem %s0, %s252
        $region32: #{tpu_custom_call.1} parent=27 // pred_fallthru
          _
        // Predicated region
        $region33: #{tpu_custom_call.1} parent=27 // pred_check
          %p254 = pneg %p123
        $region34: #{tpu_custom_call.1} parent=27 // pred_check_branch
          %256 = sbr.rel (%p254) target = $region36
        $region35: #{tpu_custom_call.1} parent=27 // pred_region
          %s257 = sand.u32 %s113, 1
          %s258 = scalar_lea.sflag [#allocation4], %s257
          %s259 = sand.u32 %s113, 1
          %s260 = smul.addr %s259, 256
          %s261 = scalar_lea.vmem [#allocation3], %s260
          %s262 = smul.u32 16, %s29
          %s264 = ssub.s32 4096, 4096
          %265 = vsyncadd %s258, %s264
          %s266 = smul.addr %s262, 2
          %s267 = smul.addr %s28, 64
          %s268 = sadd.s32 %s266, %s267
          %s269 = smul.addr %s268, 128
          %s270 = scalar_lea.hbm %s3, %s269
          %s271 = sshll.u32 %s261, 4
          %s272 = int_to_ptr.vmem [resolvable:$true] %s271
          %277 = dma.hbm_to_vmem [thread:$0]  %s270, 4096, %s272, %s258, 256, 256, 16
        $region36: #{tpu_custom_call.1} parent=27 // pred_fallthru
          _
      $region28: #{tpu_custom_call.1} parent=5 // pred_fallthru
        _
      %p278 = scmp.le.s32.totalorder 1, %s21
      %p279 = scmp.lt.s32.totalorder %s21, 5
      %p280 = pnand %p278, %p279
      %p281 = pneg %p280
      // Predicated region
      $region37: #{tpu_custom_call.1} parent=5 // pred_check
        _
      $region38: #{tpu_custom_call.1} parent=5 // pred_check_branch
        %283 = sbr.rel (%p280) target = $region40
      $region39: #{tpu_custom_call.1} parent=5 // pred_region
        %s284 = ssub.s32 %s21, 1
        %s285 = sand.u32 %s116, 1
        %s286 = scalar_lea.sflag [#allocation4], %s285
        %s287 = sand.u32 %s116, 1
        %s288 = smul.addr %s287, 256
        %s289 = scalar_lea.vmem [#allocation3], %s288
        // Predicated region
        $region41: #{tpu_custom_call.1} parent=39 // pred_check
          %p290 = pneg %p129
        $region42: #{tpu_custom_call.1} parent=39 // pred_check_branch
          %292 = sbr.rel (%p290) target = $region44
        $region43: #{tpu_custom_call.1} parent=39 // pred_region
          %293 = dma.done %s286, 4096
        $region44: #{tpu_custom_call.1} parent=39 // pred_fallthru
          _
        %p294 = scmp.lt.s32.totalorder %s30, 1
        %s295 = scalar_select %p294, %s30, 1
        %s296 = scalar_lea.vmem %s0, %s295
        %p297 = pneg %p59
        %p298 = pneg %p56
        %p299 = pneg %p80
        %p300 = pneg %p77
        %p301 = pneg %p101
        %p302 = pneg %p98
        %s303 = sand.u32 %s116, 1
        %s304 = scalar_lea.sflag [#allocation4], %s303
        %s305 = sand.u32 %s116, 1
        %s306 = smul.addr %s305, 256
        %s307 = scalar_lea.vmem [#allocation3], %s306
        %p308 = pneg %p129
        %p309 = pneg %p126
        %p310 = pneg %p150
        %p311 = pneg %p147
        %p312 = pneg %p178
        %p313 = pneg %p175
        %s314 = sand.u32 %s165, 1
        %s315 = scalar_lea.sflag [#allocation5], %s314
        %s316 = sand.u32 %s165, 1
        %s317 = smul.addr %s316, 128
        %s318 = scalar_lea.vmem [#allocation6], %s317
        %p319 = pneg %p199
        %p320 = pneg %p196
        %p321 = pneg %p220
        %p322 = pneg %p217
        %p323 = scmp.lt.s32.totalorder %s30, 1
        %s324 = scalar_select %p323, %s30, 1
        %s325 = scalar_lea.vmem %s0, %s324
        %s326 = smul.u32 16, %s31
        %s327 = smul.u32 16, %s31
        %p328 = scmp.eq.s32.totalorder %s30, 0
        %p329 = scmp.eq.s32.totalorder %s31, 0
        %p330 = pnand %p328, %p329
        %p331 = pneg %p330
        // Predicated region
        $region45: #{tpu_custom_call.1} parent=39 // pred_check
          _
        $region46: #{tpu_custom_call.1} parent=39 // pred_check_branch
          %333 = sbr.rel (%p330) target = $region48
        $region47: #{tpu_custom_call.1} parent=39 // pred_region
          %334 = vst [vmem:[#allocation7] sm:$0x1] 0.0
          %335 = vst [vmem:[#allocation9] sm:$0x1] 0.0
        $region48: #{tpu_custom_call.1} parent=39 // pred_fallthru
          _
        // Predicated region
        $region49: #{tpu_custom_call.1} parent=39 // pred_check
          %p336 = pneg %p329
        $region50: #{tpu_custom_call.1} parent=39 // pred_check_branch
          %338 = sbr.rel (%p336) target = $region52
        $region51: #{tpu_custom_call.1} parent=39 // pred_region
          %v339 = vld [vmem:[%s1] sm:$0xff]
          %v340 = vld [vmem:[%s1 + $0x8] sm:$0xff]
          %v341 = vld [vmem:[%s1 + $0x10] sm:$0xff]
          %v342 = vld [vmem:[%s1 + $0x18] sm:$0xff]
          %v343 = vld [vmem:[%s1 + $0x20] sm:$0xff]
          %v344 = vld [vmem:[%s1 + $0x28] sm:$0xff]
          %v345 = vld [vmem:[%s1 + $0x30] sm:$0xff]
          %v346 = vld [vmem:[%s1 + $0x38] sm:$0xff]
          %v347 = vld [vmem:[%s1 + $0x40] sm:$0xff]
          %v348 = vld [vmem:[%s1 + $0x48] sm:$0xff]
          %v349 = vld [vmem:[%s1 + $0x50] sm:$0xff]
          %v350 = vld [vmem:[%s1 + $0x58] sm:$0xff]
          %v351 = vld [vmem:[%s1 + $0x60] sm:$0xff]
          %v352 = vld [vmem:[%s1 + $0x68] sm:$0xff]
          %v353 = vld [vmem:[%s1 + $0x70] sm:$0xff]
          %v354 = vld [vmem:[%s1 + $0x78] sm:$0xff]
          %v355 = vld [vmem:[%s1 + $0x80] sm:$0xff]
          %v356 = vld [vmem:[%s1 + $0x88] sm:$0xff]
          %v357 = vld [vmem:[%s1 + $0x90] sm:$0xff]
          %v358 = vld [vmem:[%s1 + $0x98] sm:$0xff]
          %v359 = vld [vmem:[%s1 + $0xa0] sm:$0xff]
          %v360 = vld [vmem:[%s1 + $0xa8] sm:$0xff]
          %v361 = vld [vmem:[%s1 + $0xb0] sm:$0xff]
          %v362 = vld [vmem:[%s1 + $0xb8] sm:$0xff]
          %v363 = vld [vmem:[%s1 + $0xc0] sm:$0xff]
          %v364 = vld [vmem:[%s1 + $0xc8] sm:$0xff]
          %v365 = vld [vmem:[%s1 + $0xd0] sm:$0xff]
          %v366 = vld [vmem:[%s1 + $0xd8] sm:$0xff]
          %v367 = vld [vmem:[%s1 + $0xe0] sm:$0xff]
          %v368 = vld [vmem:[%s1 + $0xe8] sm:$0xff]
          %v369 = vld [vmem:[%s1 + $0xf0] sm:$0xff]
          %v370 = vld [vmem:[%s1 + $0xf8] sm:$0xff]
          %v371 = vld [vmem:[%s325] sm:$0x1]
          %v373 = vlaneseq
          %v374 = vshrl.u32 %v373, 7
          %v375 = vsub.s32 0, %v374
          %v376 = vrot.slane %v371, %v375
          %v378 = vmul.f32 %v339, %v376
          %v379 = vmul.f32 %v340, %v376
          %v380 = vmul.f32 %v341, %v376
          %v381 = vmul.f32 %v342, %v376
          %v382 = vmul.f32 %v343, %v376
          %v383 = vmul.f32 %v344, %v376
          %v384 = vmul.f32 %v345, %v376
          %v385 = vmul.f32 %v346, %v376
          %v386 = vmul.f32 %v347, %v376
          %v387 = vmul.f32 %v348, %v376
          %v388 = vmul.f32 %v349, %v376
          %v389 = vmul.f32 %v350, %v376
          %v390 = vmul.f32 %v351, %v376
          %v391 = vmul.f32 %v352, %v376
          %v392 = vmul.f32 %v353, %v376
          %v393 = vmul.f32 %v354, %v376
          %v394 = vmul.f32 %v355, %v376
          %v395 = vmul.f32 %v356, %v376
          %v396 = vmul.f32 %v357, %v376
          %v397 = vmul.f32 %v358, %v376
          %v398 = vmul.f32 %v359, %v376
          %v399 = vmul.f32 %v360, %v376
          %v400 = vmul.f32 %v361, %v376
          %v401 = vmul.f32 %v362, %v376
          %v402 = vmul.f32 %v363, %v376
          %v403 = vmul.f32 %v364, %v376
          %v404 = vmul.f32 %v365, %v376
          %v405 = vmul.f32 %v366, %v376
          %v406 = vmul.f32 %v367, %v376
          %v407 = vmul.f32 %v368, %v376
          %v408 = vmul.f32 %v369, %v376
          %v409 = vmul.f32 %v370, %v376
          %vm410 = vcmask 80896
          %v411 = vsel %vm410, %v378, 0.0
          %412 = vadd.xlane.f32.xlu0 %v411
          %v413 = vpop.xlane.xlu0 %412
          %v414 = vsel %vm410, %v379, 0.0
          %415 = vadd.xlane.f32.xlu0 %v414
          %v416 = vpop.xlane.xlu0 %415
          %v417 = vsel %vm410, %v380, 0.0
          %418 = vadd.xlane.f32.xlu0 %v417
          %v419 = vpop.xlane.xlu0 %418
          %v420 = vsel %vm410, %v381, 0.0
          %421 = vadd.xlane.f32.xlu0 %v420
          %v422 = vpop.xlane.xlu0 %421
          %v423 = vsel %vm410, %v382, 0.0
          %424 = vadd.xlane.f32.xlu0 %v423
          %v425 = vpop.xlane.xlu0 %424
          %v426 = vsel %vm410, %v383, 0.0
          %427 = vadd.xlane.f32.xlu0 %v426
          %v428 = vpop.xlane.xlu0 %427
          %v429 = vsel %vm410, %v384, 0.0
          %430 = vadd.xlane.f32.xlu0 %v429
          %v431 = vpop.xlane.xlu0 %430
          %v432 = vsel %vm410, %v385, 0.0
          %433 = vadd.xlane.f32.xlu0 %v432
          %v434 = vpop.xlane.xlu0 %433
          %v435 = vsel %vm410, %v386, 0.0
          %436 = vadd.xlane.f32.xlu0 %v435
          %v437 = vpop.xlane.xlu0 %436
          %v438 = vsel %vm410, %v387, 0.0
          %439 = vadd.xlane.f32.xlu0 %v438
          %v440 = vpop.xlane.xlu0 %439
          %v441 = vsel %vm410, %v388, 0.0
          %442 = vadd.xlane.f32.xlu0 %v441
          %v443 = vpop.xlane.xlu0 %442
          %v444 = vsel %vm410, %v389, 0.0
          %445 = vadd.xlane.f32.xlu0 %v444
          %v446 = vpop.xlane.xlu0 %445
          %v447 = vsel %vm410, %v390, 0.0
          %448 = vadd.xlane.f32.xlu0 %v447
          %v449 = vpop.xlane.xlu0 %448
          %v450 = vsel %vm410, %v391, 0.0
          %451 = vadd.xlane.f32.xlu0 %v450
          %v452 = vpop.xlane.xlu0 %451
          %v453 = vsel %vm410, %v392, 0.0
          %454 = vadd.xlane.f32.xlu0 %v453
          %v455 = vpop.xlane.xlu0 %454
          %v456 = vsel %vm410, %v393, 0.0
          %457 = vadd.xlane.f32.xlu0 %v456
          %v458 = vpop.xlane.xlu0 %457
          %v459 = vsel %vm410, %v394, 0.0
          %460 = vadd.xlane.f32.xlu0 %v459
          %v461 = vpop.xlane.xlu0 %460
          %v462 = vsel %vm410, %v395, 0.0
          %463 = vadd.xlane.f32.xlu0 %v462
          %v464 = vpop.xlane.xlu0 %463
          %v465 = vsel %vm410, %v396, 0.0
          %466 = vadd.xlane.f32.xlu0 %v465
          %v467 = vpop.xlane.xlu0 %466
          %v468 = vsel %vm410, %v397, 0.0
          %469 = vadd.xlane.f32.xlu0 %v468
          %v470 = vpop.xlane.xlu0 %469
          %v471 = vsel %vm410, %v398, 0.0
          %472 = vadd.xlane.f32.xlu0 %v471
          %v473 = vpop.xlane.xlu0 %472
          %v474 = vsel %vm410, %v399, 0.0
          %475 = vadd.xlane.f32.xlu0 %v474
          %v476 = vpop.xlane.xlu0 %475
          %v477 = vsel %vm410, %v400, 0.0
          %478 = vadd.xlane.f32.xlu0 %v477
          %v479 = vpop.xlane.xlu0 %478
          %v480 = vsel %vm410, %v401, 0.0
          %481 = vadd.xlane.f32.xlu0 %v480
          %v482 = vpop.xlane.xlu0 %481
          %v483 = vsel %vm410, %v402, 0.0
          %484 = vadd.xlane.f32.xlu0 %v483
          %v485 = vpop.xlane.xlu0 %484
          %v486 = vsel %vm410, %v403, 0.0
          %487 = vadd.xlane.f32.xlu0 %v486
          %v488 = vpop.xlane.xlu0 %487
          %v489 = vsel %vm410, %v404, 0.0
          %490 = vadd.xlane.f32.xlu0 %v489
          %v491 = vpop.xlane.xlu0 %490
          %v492 = vsel %vm410, %v405, 0.0
          %493 = vadd.xlane.f32.xlu0 %v492
          %v494 = vpop.xlane.xlu0 %493
          %v495 = vsel %vm410, %v406, 0.0
          %496 = vadd.xlane.f32.xlu0 %v495
          %v497 = vpop.xlane.xlu0 %496
          %v498 = vsel %vm410, %v407, 0.0
          %499 = vadd.xlane.f32.xlu0 %v498
          %v500 = vpop.xlane.xlu0 %499
          %v501 = vsel %vm410, %v408, 0.0
          %502 = vadd.xlane.f32.xlu0 %v501
          %v503 = vpop.xlane.xlu0 %502
          %v504 = vsel %vm410, %v409, 0.0
          %505 = vadd.xlane.f32.xlu0 %v504
          %v506 = vpop.xlane.xlu0 %505
          %v507 = vld [vmem:[%s2] sm:$0xff]
          %v508 = vld [vmem:[%s2 + $0x8] sm:$0xff]
          %v509 = vld [vmem:[%s2 + $0x10] sm:$0xff]
          %v510 = vld [vmem:[%s2 + $0x18] sm:$0xff]
          %v511 = vld [vmem:[%s2 + $0x20] sm:$0xff]
          %v512 = vld [vmem:[%s2 + $0x28] sm:$0xff]
          %v513 = vld [vmem:[%s2 + $0x30] sm:$0xff]
          %v514 = vld [vmem:[%s2 + $0x38] sm:$0xff]
          %v515 = vld [vmem:[%s2 + $0x40] sm:$0xff]
          %v516 = vld [vmem:[%s2 + $0x48] sm:$0xff]
          %v517 = vld [vmem:[%s2 + $0x50] sm:$0xff]
          %v518 = vld [vmem:[%s2 + $0x58] sm:$0xff]
          %v519 = vld [vmem:[%s2 + $0x60] sm:$0xff]
          %v520 = vld [vmem:[%s2 + $0x68] sm:$0xff]
          %v521 = vld [vmem:[%s2 + $0x70] sm:$0xff]
          %v522 = vld [vmem:[%s2 + $0x78] sm:$0xff]
          %v523 = vld [vmem:[%s2 + $0x80] sm:$0xff]
          %v524 = vld [vmem:[%s2 + $0x88] sm:$0xff]
          %v525 = vld [vmem:[%s2 + $0x90] sm:$0xff]
          %v526 = vld [vmem:[%s2 + $0x98] sm:$0xff]
          %v527 = vld [vmem:[%s2 + $0xa0] sm:$0xff]
          %v528 = vld [vmem:[%s2 + $0xa8] sm:$0xff]
          %v529 = vld [vmem:[%s2 + $0xb0] sm:$0xff]
          %v530 = vld [vmem:[%s2 + $0xb8] sm:$0xff]
          %v531 = vld [vmem:[%s2 + $0xc0] sm:$0xff]
          %v532 = vld [vmem:[%s2 + $0xc8] sm:$0xff]
          %v533 = vld [vmem:[%s2 + $0xd0] sm:$0xff]
          %v534 = vld [vmem:[%s2 + $0xd8] sm:$0xff]
          %v535 = vld [vmem:[%s2 + $0xe0] sm:$0xff]
          %v536 = vld [vmem:[%s2 + $0xe8] sm:$0xff]
          %v537 = vld [vmem:[%s2 + $0xf0] sm:$0xff]
          %v538 = vld [vmem:[%s2 + $0xf8] sm:$0xff]
          %v539 = vadd.f32 %v413, %v507
          %v540 = vadd.f32 %v416, %v508
          %v541 = vadd.f32 %v419, %v509
          %v542 = vadd.f32 %v422, %v510
          %v543 = vadd.f32 %v425, %v511
          %v544 = vadd.f32 %v428, %v512
          %v545 = vadd.f32 %v431, %v513
          %v546 = vadd.f32 %v434, %v514
          %v547 = vadd.f32 %v437, %v515
          %v548 = vadd.f32 %v440, %v516
          %v549 = vadd.f32 %v443, %v517
          %v550 = vadd.f32 %v446, %v518
          %v551 = vadd.f32 %v449, %v519
          %v552 = vadd.f32 %v452, %v520
          %v553 = vadd.f32 %v455, %v521
          %v554 = vadd.f32 %v458, %v522
          %v555 = vadd.f32 %v461, %v523
          %v556 = vadd.f32 %v464, %v524
          %v557 = vadd.f32 %v467, %v525
          %v558 = vadd.f32 %v470, %v526
          %v559 = vadd.f32 %v473, %v527
          %v560 = vadd.f32 %v476, %v528
          %v561 = vadd.f32 %v479, %v529
          %v562 = vadd.f32 %v482, %v530
          %v563 = vadd.f32 %v485, %v531
          %v564 = vadd.f32 %v488, %v532
          %v565 = vadd.f32 %v491, %v533
          %v566 = vadd.f32 %v494, %v534
          %v567 = vadd.f32 %v497, %v535
          %v568 = vadd.f32 %v500, %v536
          %v569 = vadd.f32 %v503, %v537
          %v570 = vadd.f32 %v506, %v538
          %v571 = vxor.u32 %v539, 2147483648
          %v572 = vxor.u32 %v540, 2147483648
          %v573 = vxor.u32 %v541, 2147483648
          %v574 = vxor.u32 %v542, 2147483648
          %v575 = vxor.u32 %v543, 2147483648
          %v576 = vxor.u32 %v544, 2147483648
          %v577 = vxor.u32 %v545, 2147483648
          %v578 = vxor.u32 %v546, 2147483648
          %v579 = vxor.u32 %v547, 2147483648
          %v580 = vxor.u32 %v548, 2147483648
          %v581 = vxor.u32 %v549, 2147483648
          %v582 = vxor.u32 %v550, 2147483648
          %v583 = vxor.u32 %v551, 2147483648
          %v584 = vxor.u32 %v552, 2147483648
          %v585 = vxor.u32 %v553, 2147483648
          %v586 = vxor.u32 %v554, 2147483648
          %v587 = vxor.u32 %v555, 2147483648
          %v588 = vxor.u32 %v556, 2147483648
          %v589 = vxor.u32 %v557, 2147483648
          %v590 = vxor.u32 %v558, 2147483648
          %v591 = vxor.u32 %v559, 2147483648
          %v592 = vxor.u32 %v560, 2147483648
          %v593 = vxor.u32 %v561, 2147483648
          %v594 = vxor.u32 %v562, 2147483648
          %v595 = vxor.u32 %v563, 2147483648
          %v596 = vxor.u32 %v564, 2147483648
          %v597 = vxor.u32 %v565, 2147483648
          %v598 = vxor.u32 %v566, 2147483648
          %v599 = vxor.u32 %v567, 2147483648
          %v600 = vxor.u32 %v568, 2147483648
          %v601 = vxor.u32 %v569, 2147483648
          %v602 = vxor.u32 %v570, 2147483648
          %v603 = vmul.f32 %v571, 1.442695
          %v604 = vpow.pop %v603
          %v605 = vmul.f32 %v572, 1.442695
          %v606 = vpow.pop %v605
          %v607 = vmul.f32 %v573, 1.442695
          %v608 = vpow.pop %v607
          %v609 = vmul.f32 %v574, 1.442695
          %v610 = vpow.pop %v609
          %v611 = vmul.f32 %v575, 1.442695
          %v612 = vpow.pop %v611
          %v613 = vmul.f32 %v576, 1.442695
          %v614 = vpow.pop %v613
          %v615 = vmul.f32 %v577, 1.442695
          %v616 = vpow.pop %v615
          %v617 = vmul.f32 %v578, 1.442695
          %v618 = vpow.pop %v617
          %v619 = vmul.f32 %v579, 1.442695
          %v620 = vpow.pop %v619
          %v621 = vmul.f32 %v580, 1.442695
          %v622 = vpow.pop %v621
          %v623 = vmul.f32 %v581, 1.442695
          %v624 = vpow.pop %v623
          %v625 = vmul.f32 %v582, 1.442695
          %v626 = vpow.pop %v625
          %v627 = vmul.f32 %v583, 1.442695
          %v628 = vpow.pop %v627
          %v629 = vmul.f32 %v584, 1.442695
          %v630 = vpow.pop %v629
          %v631 = vmul.f32 %v585, 1.442695
          %v632 = vpow.pop %v631
          %v633 = vmul.f32 %v586, 1.442695
          %v634 = vpow.pop %v633
          %v635 = vmul.f32 %v587, 1.442695
          %v636 = vpow.pop %v635
          %v637 = vmul.f32 %v588, 1.442695
          %v638 = vpow.pop %v637
          %v639 = vmul.f32 %v589, 1.442695
          %v640 = vpow.pop %v639
          %v641 = vmul.f32 %v590, 1.442695
          %v642 = vpow.pop %v641
          %v643 = vmul.f32 %v591, 1.442695
          %v644 = vpow.pop %v643
          %v645 = vmul.f32 %v592, 1.442695
          %v646 = vpow.pop %v645
          %v647 = vmul.f32 %v593, 1.442695
          %v648 = vpow.pop %v647
          %v649 = vmul.f32 %v594, 1.442695
          %v650 = vpow.pop %v649
          %v651 = vmul.f32 %v595, 1.442695
          %v652 = vpow.pop %v651
          %v653 = vmul.f32 %v596, 1.442695
          %v654 = vpow.pop %v653
          %v655 = vmul.f32 %v597, 1.442695
          %v656 = vpow.pop %v655
          %v657 = vmul.f32 %v598, 1.442695
          %v658 = vpow.pop %v657
          %v659 = vmul.f32 %v599, 1.442695
          %v660 = vpow.pop %v659
          %v661 = vmul.f32 %v600, 1.442695
          %v662 = vpow.pop %v661
          %v663 = vmul.f32 %v601, 1.442695
          %v664 = vpow.pop %v663
          %v665 = vmul.f32 %v602, 1.442695
          %v666 = vpow.pop %v665
          %v667 = vadd.f32 %v604, 1.0
          %v668 = vadd.f32 %v606, 1.0
          %v669 = vadd.f32 %v608, 1.0
          %v670 = vadd.f32 %v610, 1.0
          %v671 = vadd.f32 %v612, 1.0
          %v672 = vadd.f32 %v614, 1.0
          %v673 = vadd.f32 %v616, 1.0
          %v674 = vadd.f32 %v618, 1.0
          %v675 = vadd.f32 %v620, 1.0
          %v676 = vadd.f32 %v622, 1.0
          %v677 = vadd.f32 %v624, 1.0
          %v678 = vadd.f32 %v626, 1.0
          %v679 = vadd.f32 %v628, 1.0
          %v680 = vadd.f32 %v630, 1.0
          %v681 = vadd.f32 %v632, 1.0
          %v682 = vadd.f32 %v634, 1.0
          %v683 = vadd.f32 %v636, 1.0
          %v684 = vadd.f32 %v638, 1.0
          %v685 = vadd.f32 %v640, 1.0
          %v686 = vadd.f32 %v642, 1.0
          %v687 = vadd.f32 %v644, 1.0
          %v688 = vadd.f32 %v646, 1.0
          %v689 = vadd.f32 %v648, 1.0
          %v690 = vadd.f32 %v650, 1.0
          %v691 = vadd.f32 %v652, 1.0
          %v692 = vadd.f32 %v654, 1.0
          %v693 = vadd.f32 %v656, 1.0
          %v694 = vadd.f32 %v658, 1.0
          %v695 = vadd.f32 %v660, 1.0
          %v696 = vadd.f32 %v662, 1.0
          %v697 = vadd.f32 %v664, 1.0
          %v698 = vadd.f32 %v666, 1.0
          %v699 = vrcp.pop %v667
          %v700 = vmul.f32 1.0, %v699
          %v701 = vrcp.pop %v668
          %v702 = vmul.f32 1.0, %v701
          %v703 = vrcp.pop %v669
          %v704 = vmul.f32 1.0, %v703
          %v705 = vrcp.pop %v670
          %v706 = vmul.f32 1.0, %v705
          %v707 = vrcp.pop %v671
          %v708 = vmul.f32 1.0, %v707
          %v709 = vrcp.pop %v672
          %v710 = vmul.f32 1.0, %v709
          %v711 = vrcp.pop %v673
          %v712 = vmul.f32 1.0, %v711
          %v713 = vrcp.pop %v674
          %v714 = vmul.f32 1.0, %v713
          %v715 = vrcp.pop %v675
          %v716 = vmul.f32 1.0, %v715
          %v717 = vrcp.pop %v676
          %v718 = vmul.f32 1.0, %v717
          %v719 = vrcp.pop %v677
          %v720 = vmul.f32 1.0, %v719
          %v721 = vrcp.pop %v678
          %v722 = vmul.f32 1.0, %v721
          %v723 = vrcp.pop %v679
          %v724 = vmul.f32 1.0, %v723
          %v725 = vrcp.pop %v680
          %v726 = vmul.f32 1.0, %v725
          %v727 = vrcp.pop %v681
          %v728 = vmul.f32 1.0, %v727
          %v729 = vrcp.pop %v682
          %v730 = vmul.f32 1.0, %v729
          %v731 = vrcp.pop %v683
          %v732 = vmul.f32 1.0, %v731
          %v733 = vrcp.pop %v684
          %v734 = vmul.f32 1.0, %v733
          %v735 = vrcp.pop %v685
          %v736 = vmul.f32 1.0, %v735
          %v737 = vrcp.pop %v686
          %v738 = vmul.f32 1.0, %v737
          %v739 = vrcp.pop %v687
          %v740 = vmul.f32 1.0, %v739
          %v741 = vrcp.pop %v688
          %v742 = vmul.f32 1.0, %v741
          %v743 = vrcp.pop %v689
          %v744 = vmul.f32 1.0, %v743
          %v745 = vrcp.pop %v690
          %v746 = vmul.f32 1.0, %v745
          %v747 = vrcp.pop %v691
          %v748 = vmul.f32 1.0, %v747
          %v749 = vrcp.pop %v692
          %v750 = vmul.f32 1.0, %v749
          %v751 = vrcp.pop %v693
          %v752 = vmul.f32 1.0, %v751
          %v753 = vrcp.pop %v694
          %v754 = vmul.f32 1.0, %v753
          %v755 = vrcp.pop %v695
          %v756 = vmul.f32 1.0, %v755
          %v757 = vrcp.pop %v696
          %v758 = vmul.f32 1.0, %v757
          %v759 = vrcp.pop %v697
          %v760 = vmul.f32 1.0, %v759
          %v761 = vrcp.pop %v698
          %v762 = vmul.f32 1.0, %v761
          %v763 = vld [vmem:[%s4] sm:$0xff]
          %v764 = vld [vmem:[%s4 + $0x8] sm:$0xff]
          %v765 = vld [vmem:[%s4 + $0x10] sm:$0xff]
          %v766 = vld [vmem:[%s4 + $0x18] sm:$0xff]
          %v767 = vld [vmem:[%s4 + $0x20] sm:$0xff]
          %v768 = vld [vmem:[%s4 + $0x28] sm:$0xff]
          %v769 = vld [vmem:[%s4 + $0x30] sm:$0xff]
          %v770 = vld [vmem:[%s4 + $0x38] sm:$0xff]
          %v771 = vld [vmem:[%s4 + $0x40] sm:$0xff]
          %v772 = vld [vmem:[%s4 + $0x48] sm:$0xff]
          %v773 = vld [vmem:[%s4 + $0x50] sm:$0xff]
          %v774 = vld [vmem:[%s4 + $0x58] sm:$0xff]
          %v775 = vld [vmem:[%s4 + $0x60] sm:$0xff]
          %v776 = vld [vmem:[%s4 + $0x68] sm:$0xff]
          %v777 = vld [vmem:[%s4 + $0x70] sm:$0xff]
          %v778 = vld [vmem:[%s4 + $0x78] sm:$0xff]
          %v779 = vld [vmem:[%s4 + $0x80] sm:$0xff]
          %v780 = vld [vmem:[%s4 + $0x88] sm:$0xff]
          %v781 = vld [vmem:[%s4 + $0x90] sm:$0xff]
          %v782 = vld [vmem:[%s4 + $0x98] sm:$0xff]
          %v783 = vld [vmem:[%s4 + $0xa0] sm:$0xff]
          %v784 = vld [vmem:[%s4 + $0xa8] sm:$0xff]
          %v785 = vld [vmem:[%s4 + $0xb0] sm:$0xff]
          %v786 = vld [vmem:[%s4 + $0xb8] sm:$0xff]
          %v787 = vld [vmem:[%s4 + $0xc0] sm:$0xff]
          %v788 = vld [vmem:[%s4 + $0xc8] sm:$0xff]
          %v789 = vld [vmem:[%s4 + $0xd0] sm:$0xff]
          %v790 = vld [vmem:[%s4 + $0xd8] sm:$0xff]
          %v791 = vld [vmem:[%s4 + $0xe0] sm:$0xff]
          %v792 = vld [vmem:[%s4 + $0xe8] sm:$0xff]
          %v793 = vld [vmem:[%s4 + $0xf0] sm:$0xff]
          %v794 = vld [vmem:[%s4 + $0xf8] sm:$0xff]
          %796 = vset.pattern.permute.xlu0 0
          %797 = vperm.xlu0 %796, %v700
          %v798 = vpop.permute.xlu0 %797
          %801 = vset.pattern.permute.xlu0 0
          %802 = vperm.xlu0 %801, %v702
          %v803 = vpop.permute.xlu0 %802
          %806 = vset.pattern.permute.xlu0 0
          %807 = vperm.xlu0 %806, %v704
          %v808 = vpop.permute.xlu0 %807
          %811 = vset.pattern.permute.xlu0 0
          %812 = vperm.xlu0 %811, %v706
          %v813 = vpop.permute.xlu0 %812
          %816 = vset.pattern.permute.xlu0 0
          %817 = vperm.xlu0 %816, %v708
          %v818 = vpop.permute.xlu0 %817
          %821 = vset.pattern.permute.xlu0 0
          %822 = vperm.xlu0 %821, %v710
          %v823 = vpop.permute.xlu0 %822
          %826 = vset.pattern.permute.xlu0 0
          %827 = vperm.xlu0 %826, %v712
          %v828 = vpop.permute.xlu0 %827
          %831 = vset.pattern.permute.xlu0 0
          %832 = vperm.xlu0 %831, %v714
          %v833 = vpop.permute.xlu0 %832
          %836 = vset.pattern.permute.xlu0 0
          %837 = vperm.xlu0 %836, %v716
          %v838 = vpop.permute.xlu0 %837
          %841 = vset.pattern.permute.xlu0 0
          %842 = vperm.xlu0 %841, %v718
          %v843 = vpop.permute.xlu0 %842
          %846 = vset.pattern.permute.xlu0 0
          %847 = vperm.xlu0 %846, %v720
          %v848 = vpop.permute.xlu0 %847
          %851 = vset.pattern.permute.xlu0 0
          %852 = vperm.xlu0 %851, %v722
          %v853 = vpop.permute.xlu0 %852
          %856 = vset.pattern.permute.xlu0 0
          %857 = vperm.xlu0 %856, %v724
          %v858 = vpop.permute.xlu0 %857
          %861 = vset.pattern.permute.xlu0 0
          %862 = vperm.xlu0 %861, %v726
          %v863 = vpop.permute.xlu0 %862
          %866 = vset.pattern.permute.xlu0 0
          %867 = vperm.xlu0 %866, %v728
          %v868 = vpop.permute.xlu0 %867
          %871 = vset.pattern.permute.xlu0 0
          %872 = vperm.xlu0 %871, %v730
          %v873 = vpop.permute.xlu0 %872
          %876 = vset.pattern.permute.xlu0 0
          %877 = vperm.xlu0 %876, %v732
          %v878 = vpop.permute.xlu0 %877
          %881 = vset.pattern.permute.xlu0 0
          %882 = vperm.xlu0 %881, %v734
          %v883 = vpop.permute.xlu0 %882
          %886 = vset.pattern.permute.xlu0 0
          %887 = vperm.xlu0 %886, %v736
          %v888 = vpop.permute.xlu0 %887
          %891 = vset.pattern.permute.xlu0 0
          %892 = vperm.xlu0 %891, %v738
          %v893 = vpop.permute.xlu0 %892
          %896 = vset.pattern.permute.xlu0 0
          %897 = vperm.xlu0 %896, %v740
          %v898 = vpop.permute.xlu0 %897
          %901 = vset.pattern.permute.xlu0 0
          %902 = vperm.xlu0 %901, %v742
          %v903 = vpop.permute.xlu0 %902
          %906 = vset.pattern.permute.xlu0 0
          %907 = vperm.xlu0 %906, %v744
          %v908 = vpop.permute.xlu0 %907
          %911 = vset.pattern.permute.xlu0 0
          %912 = vperm.xlu0 %911, %v746
          %v913 = vpop.permute.xlu0 %912
          %916 = vset.pattern.permute.xlu0 0
          %917 = vperm.xlu0 %916, %v748
          %v918 = vpop.permute.xlu0 %917
          %921 = vset.pattern.permute.xlu0 0
          %922 = vperm.xlu0 %921, %v750
          %v923 = vpop.permute.xlu0 %922
          %926 = vset.pattern.permute.xlu0 0
          %927 = vperm.xlu0 %926, %v752
          %v928 = vpop.permute.xlu0 %927
          %931 = vset.pattern.permute.xlu0 0
          %932 = vperm.xlu0 %931, %v754
          %v933 = vpop.permute.xlu0 %932
          %936 = vset.pattern.permute.xlu0 0
          %937 = vperm.xlu0 %936, %v756
          %v938 = vpop.permute.xlu0 %937
          %941 = vset.pattern.permute.xlu0 0
          %942 = vperm.xlu0 %941, %v758
          %v943 = vpop.permute.xlu0 %942
          %946 = vset.pattern.permute.xlu0 0
          %947 = vperm.xlu0 %946, %v760
          %v948 = vpop.permute.xlu0 %947
          %951 = vset.pattern.permute.xlu0 0
          %952 = vperm.xlu0 %951, %v762
          %v953 = vpop.permute.xlu0 %952
          %v955 = vmul.f32 %v763, %v798
          %v956 = vmul.f32 %v764, %v803
          %v957 = vmul.f32 %v765, %v808
          %v958 = vmul.f32 %v766, %v813
          %v959 = vmul.f32 %v767, %v818
          %v960 = vmul.f32 %v768, %v823
          %v961 = vmul.f32 %v769, %v828
          %v962 = vmul.f32 %v770, %v833
          %v963 = vmul.f32 %v771, %v838
          %v964 = vmul.f32 %v772, %v843
          %v965 = vmul.f32 %v773, %v848
          %v966 = vmul.f32 %v774, %v853
          %v967 = vmul.f32 %v775, %v858
          %v968 = vmul.f32 %v776, %v863
          %v969 = vmul.f32 %v777, %v868
          %v970 = vmul.f32 %v778, %v873
          %v971 = vmul.f32 %v779, %v878
          %v972 = vmul.f32 %v780, %v883
          %v973 = vmul.f32 %v781, %v888
          %v974 = vmul.f32 %v782, %v893
          %v975 = vmul.f32 %v783, %v898
          %v976 = vmul.f32 %v784, %v903
          %v977 = vmul.f32 %v785, %v908
          %v978 = vmul.f32 %v786, %v913
          %v979 = vmul.f32 %v787, %v918
          %v980 = vmul.f32 %v788, %v923
          %v981 = vmul.f32 %v789, %v928
          %v982 = vmul.f32 %v790, %v933
          %v983 = vmul.f32 %v791, %v938
          %v984 = vmul.f32 %v792, %v943
          %v985 = vmul.f32 %v793, %v948
          %v986 = vmul.f32 %v794, %v953
          %987 = vst [vmem:[#allocation2] sm:$0xff] %v955
          %988 = vst [vmem:[#allocation2 + $0x8] sm:$0xff] %v956
          %989 = vst [vmem:[#allocation2 + $0x10] sm:$0xff] %v957
          %990 = vst [vmem:[#allocation2 + $0x18] sm:$0xff] %v958
          %991 = vst [vmem:[#allocation2 + $0x20] sm:$0xff] %v959
          %992 = vst [vmem:[#allocation2 + $0x28] sm:$0xff] %v960
          %993 = vst [vmem:[#allocation2 + $0x30] sm:$0xff] %v961
          %994 = vst [vmem:[#allocation2 + $0x38] sm:$0xff] %v962
          %995 = vst [vmem:[#allocation2 + $0x40] sm:$0xff] %v963
          %996 = vst [vmem:[#allocation2 + $0x48] sm:$0xff] %v964
          %997 = vst [vmem:[#allocation2 + $0x50] sm:$0xff] %v965
          %998 = vst [vmem:[#allocation2 + $0x58] sm:$0xff] %v966
          %999 = vst [vmem:[#allocation2 + $0x60] sm:$0xff] %v967
          %1000 = vst [vmem:[#allocation2 + $0x68] sm:$0xff] %v968
          %1001 = vst [vmem:[#allocation2 + $0x70] sm:$0xff] %v969
          %1002 = vst [vmem:[#allocation2 + $0x78] sm:$0xff] %v970
          %1003 = vst [vmem:[#allocation2 + $0x80] sm:$0xff] %v971
          %1004 = vst [vmem:[#allocation2 + $0x88] sm:$0xff] %v972
          %1005 = vst [vmem:[#allocation2 + $0x90] sm:$0xff] %v973
          %1006 = vst [vmem:[#allocation2 + $0x98] sm:$0xff] %v974
          %1007 = vst [vmem:[#allocation2 + $0xa0] sm:$0xff] %v975
          %1008 = vst [vmem:[#allocation2 + $0xa8] sm:$0xff] %v976
          %1009 = vst [vmem:[#allocation2 + $0xb0] sm:$0xff] %v977
          %1010 = vst [vmem:[#allocation2 + $0xb8] sm:$0xff] %v978
          %1011 = vst [vmem:[#allocation2 + $0xc0] sm:$0xff] %v979
          %1012 = vst [vmem:[#allocation2 + $0xc8] sm:$0xff] %v980
          %1013 = vst [vmem:[#allocation2 + $0xd0] sm:$0xff] %v981
          %1014 = vst [vmem:[#allocation2 + $0xd8] sm:$0xff] %v982
          %1015 = vst [vmem:[#allocation2 + $0xe0] sm:$0xff] %v983
          %1016 = vst [vmem:[#allocation2 + $0xe8] sm:$0xff] %v984
          %1017 = vst [vmem:[#allocation2 + $0xf0] sm:$0xff] %v985
          %1018 = vst [vmem:[#allocation2 + $0xf8] sm:$0xff] %v986
        $region52: #{tpu_custom_call.1} parent=39 // pred_fallthru
          _
        %v1019 = vld [vmem:[%s289] sm:$0xff]
        %v1020 = vld [vmem:[%s289 + $0x8] sm:$0xff]
        %v1021 = vld [vmem:[%s289 + $0x10] sm:$0xff]
        %v1022 = vld [vmem:[%s289 + $0x18] sm:$0xff]
        %v1023 = vld [vmem:[%s289 + $0x20] sm:$0xff]
        %v1024 = vld [vmem:[%s289 + $0x28] sm:$0xff]
        %v1025 = vld [vmem:[%s289 + $0x30] sm:$0xff]
        %v1026 = vld [vmem:[%s289 + $0x38] sm:$0xff]
        %v1027 = vld [vmem:[%s289 + $0x40] sm:$0xff]
        %v1028 = vld [vmem:[%s289 + $0x48] sm:$0xff]
        %v1029 = vld [vmem:[%s289 + $0x50] sm:$0xff]
        %v1030 = vld [vmem:[%s289 + $0x58] sm:$0xff]
        %v1031 = vld [vmem:[%s289 + $0x60] sm:$0xff]
        %v1032 = vld [vmem:[%s289 + $0x68] sm:$0xff]
        %v1033 = vld [vmem:[%s289 + $0x70] sm:$0xff]
        %v1034 = vld [vmem:[%s289 + $0x78] sm:$0xff]
        %v1035 = vld [vmem:[%s289 + $0x80] sm:$0xff]
        %v1036 = vld [vmem:[%s289 + $0x88] sm:$0xff]
        %v1037 = vld [vmem:[%s289 + $0x90] sm:$0xff]
        %v1038 = vld [vmem:[%s289 + $0x98] sm:$0xff]
        %v1039 = vld [vmem:[%s289 + $0xa0] sm:$0xff]
        %v1040 = vld [vmem:[%s289 + $0xa8] sm:$0xff]
        %v1041 = vld [vmem:[%s289 + $0xb0] sm:$0xff]
        %v1042 = vld [vmem:[%s289 + $0xb8] sm:$0xff]
        %v1043 = vld [vmem:[%s289 + $0xc0] sm:$0xff]
        %v1044 = vld [vmem:[%s289 + $0xc8] sm:$0xff]
        %v1045 = vld [vmem:[%s289 + $0xd0] sm:$0xff]
        %v1046 = vld [vmem:[%s289 + $0xd8] sm:$0xff]
        %v1047 = vld [vmem:[%s289 + $0xe0] sm:$0xff]
        %v1048 = vld [vmem:[%s289 + $0xe8] sm:$0xff]
        %v1049 = vld [vmem:[%s289 + $0xf0] sm:$0xff]
        %v1050 = vld [vmem:[%s289 + $0xf8] sm:$0xff]
        %v1051 = vld [vmem:[#allocation2] sm:$0xff]
        %v1052 = vld [vmem:[#allocation2 + $0x8] sm:$0xff]
        %v1053 = vld [vmem:[#allocation2 + $0x10] sm:$0xff]
        %v1054 = vld [vmem:[#allocation2 + $0x18] sm:$0xff]
        %v1055 = vld [vmem:[#allocation2 + $0x20] sm:$0xff]
        %v1056 = vld [vmem:[#allocation2 + $0x28] sm:$0xff]
        %v1057 = vld [vmem:[#allocation2 + $0x30] sm:$0xff]
        %v1058 = vld [vmem:[#allocation2 + $0x38] sm:$0xff]
        %v1059 = vld [vmem:[#allocation2 + $0x40] sm:$0xff]
        %v1060 = vld [vmem:[#allocation2 + $0x48] sm:$0xff]
        %v1061 = vld [vmem:[#allocation2 + $0x50] sm:$0xff]
        %v1062 = vld [vmem:[#allocation2 + $0x58] sm:$0xff]
        %v1063 = vld [vmem:[#allocation2 + $0x60] sm:$0xff]
        %v1064 = vld [vmem:[#allocation2 + $0x68] sm:$0xff]
        %v1065 = vld [vmem:[#allocation2 + $0x70] sm:$0xff]
        %v1066 = vld [vmem:[#allocation2 + $0x78] sm:$0xff]
        %v1067 = vld [vmem:[#allocation2 + $0x80] sm:$0xff]
        %v1068 = vld [vmem:[#allocation2 + $0x88] sm:$0xff]
        %v1069 = vld [vmem:[#allocation2 + $0x90] sm:$0xff]
        %v1070 = vld [vmem:[#allocation2 + $0x98] sm:$0xff]
        %v1071 = vld [vmem:[#allocation2 + $0xa0] sm:$0xff]
        %v1072 = vld [vmem:[#allocation2 + $0xa8] sm:$0xff]
        %v1073 = vld [vmem:[#allocation2 + $0xb0] sm:$0xff]
        %v1074 = vld [vmem:[#allocation2 + $0xb8] sm:$0xff]
        %v1075 = vld [vmem:[#allocation2 + $0xc0] sm:$0xff]
        %v1076 = vld [vmem:[#allocation2 + $0xc8] sm:$0xff]
        %v1077 = vld [vmem:[#allocation2 + $0xd0] sm:$0xff]
        %v1078 = vld [vmem:[#allocation2 + $0xd8] sm:$0xff]
        %v1079 = vld [vmem:[#allocation2 + $0xe0] sm:$0xff]
        %v1080 = vld [vmem:[#allocation2 + $0xe8] sm:$0xff]
        %v1081 = vld [vmem:[#allocation2 + $0xf0] sm:$0xff]
        %v1082 = vld [vmem:[#allocation2 + $0xf8] sm:$0xff]
        %1083 = vmatprep.subr.mxu0 0.0
        %1084 = vmatpush1.msra.mxu0 %v1051
        %1085 = vmatprep.subr.mxu0 0.0
        %1086 = vmatpush1.msra.mxu0 %v1052
        %1087 = vmatprep.subr.mxu0 0.0
        %1088 = vmatpush1.msra.mxu0 %v1053
        %1089 = vmatprep.subr.mxu0 0.0
        %1090 = vmatpush1.msra.mxu0 %v1054
        %1091 = vmatprep.subr.mxu0 0.0
        %1092 = vmatpush1.msra.mxu0 %v1055
        %1093 = vmatprep.subr.mxu0 0.0
        %1094 = vmatpush1.msra.mxu0 %v1056
        %1095 = vmatprep.subr.mxu0 0.0
        %1096 = vmatpush1.msra.mxu0 %v1057
        %1097 = vmatprep.subr.mxu0 0.0
        %1098 = vmatpush1.msra.mxu0 %v1058
        %1099 = vmatprep.subr.mxu0 0.0
        %1100 = vmatpush1.msra.mxu0 %v1059
        %1101 = vmatprep.subr.mxu0 0.0
        %1102 = vmatpush1.msra.mxu0 %v1060
        %1103 = vmatprep.subr.mxu0 0.0
        %1104 = vmatpush1.msra.mxu0 %v1061
        %1105 = vmatprep.subr.mxu0 0.0
        %1106 = vmatpush1.msra.mxu0 %v1062
        %1107 = vmatprep.subr.mxu0 0.0
        %1108 = vmatpush1.msra.mxu0 %v1063
        %1109 = vmatprep.subr.mxu0 0.0
        %1110 = vmatpush1.msra.mxu0 %v1064
        %1111 = vmatprep.subr.mxu0 0.0
        %1112 = vmatpush1.msra.mxu0 %v1065
        %1113 = vmatprep.subr.mxu0 0.0
        %1114 = vmatpush1.msra.mxu0 %v1066
        %1115 = vmatprep.subr.mxu0 0.0
        %1116 = vmatpush1.msra.mxu0 %v1067
        %1117 = vmatprep.subr.mxu0 0.0
        %1118 = vmatpush1.msra.mxu0 %v1068
        %1119 = vmatprep.subr.mxu0 0.0
        %1120 = vmatpush1.msra.mxu0 %v1069
        %1121 = vmatprep.subr.mxu0 0.0
        %1122 = vmatpush1.msra.mxu0 %v1070
        %1123 = vmatprep.subr.mxu0 0.0
        %1124 = vmatpush1.msra.mxu0 %v1071
        %1125 = vmatprep.subr.mxu0 0.0
        %1126 = vmatpush1.msra.mxu0 %v1072
        %1127 = vmatprep.subr.mxu0 0.0
        %1128 = vmatpush1.msra.mxu0 %v1073
        %1129 = vmatprep.subr.mxu0 0.0
        %1130 = vmatpush1.msra.mxu0 %v1074
        %1131 = vmatprep.subr.mxu0 0.0
        %1132 = vmatpush1.msra.mxu0 %v1075
        %1133 = vmatprep.subr.mxu0 0.0
        %1134 = vmatpush1.msra.mxu0 %v1076
        %1135 = vmatprep.subr.mxu0 0.0
        %1136 = vmatpush1.msra.mxu0 %v1077
        %1137 = vmatprep.subr.mxu0 0.0
        %1138 = vmatpush1.msra.mxu0 %v1078
        %1139 = vmatprep.subr.mxu0 0.0
        %1140 = vmatpush1.msra.mxu0 %v1079
        %1141 = vmatprep.subr.mxu0 0.0
        %1142 = vmatpush1.msra.mxu0 %v1080
        %1143 = vmatprep.subr.mxu0 0.0
        %1144 = vmatpush1.msra.mxu0 %v1081
        %1145 = vmatprep.subr.mxu0 0.0
        %1146 = vmatpush1.msra.mxu0 %v1082
        %1147 = vmatprep.mubr.f32.mxu0 %v1020
        %1148 = vmatmul.mubr.f32.gmra.mrb[0].mxu0 %v1019
        %v1149 = vpop.f32.mrb[0].mxu0
        %v1150 = vadd.f32 0.0, %v1149
        %v1151 = vpop.f32.mrb[0].mxu0
        %1152 = vmatprep.mubr.f32.mxu0 %v1022
        %1153 = vmatmul.mubr.f32.gmra.mrb[0].mxu0 %v1021
        %v1154 = vpop.f32.mrb[0].mxu0
        %v1155 = vadd.f32 0.0, %v1154
        %v1156 = vpop.f32.mrb[0].mxu0
        %1157 = vmatprep.mubr.f32.mxu0 %v1024
        %1158 = vmatmul.mubr.f32.gmra.mrb[0].mxu0 %v1023
        %v1159 = vpop.f32.mrb[0].mxu0
        %v1160 = vadd.f32 0.0, %v1159
        %v1161 = vpop.f32.mrb[0].mxu0
        %1162 = vmatprep.mubr.f32.mxu0 %v1026
        %1163 = vmatmul.mubr.f32.gmra.mrb[0].mxu0 %v1025
        %v1164 = vpop.f32.mrb[0].mxu0
        %v1165 = vadd.f32 0.0, %v1164
        %v1166 = vpop.f32.mrb[0].mxu0
        %1167 = vmatprep.mubr.f32.mxu0 %v1028
        %1168 = vmatmul.mubr.f32.gmra.mrb[0].mxu0 %v1027
        %v1169 = vpop.f32.mrb[0].mxu0
        %v1170 = vadd.f32 0.0, %v1169
        %v1171 = vpop.f32.mrb[0].mxu0
        %1172 = vmatprep.mubr.f32.mxu0 %v1030
        %1173 = vmatmul.mubr.f32.gmra.mrb[0].mxu0 %v1029
        %v1174 = vpop.f32.mrb[0].mxu0
        %v1175 = vadd.f32 0.0, %v1174
        %v1176 = vpop.f32.mrb[0].mxu0
        %1177 = vmatprep.mubr.f32.mxu0 %v1032
        %1178 = vmatmul.mubr.f32.gmra.mrb[0].mxu0 %v1031
        %v1179 = vpop.f32.mrb[0].mxu0
        %v1180 = vadd.f32 0.0, %v1179
        %v1181 = vpop.f32.mrb[0].mxu0
        %1182 = vmatprep.mubr.f32.mxu0 %v1034
        %1183 = vmatmul.mubr.f32.gmra.mrb[0].mxu0 %v1033
        %v1184 = vpop.f32.mrb[0].mxu0
        %v1185 = vadd.f32 0.0, %v1184
        %v1186 = vpop.f32.mrb[0].mxu0
        %1187 = vmatprep.mubr.f32.mxu0 %v1036
        %1188 = vmatmul.mubr.f32.gmra.mrb[0].mxu0 %v1035
        %v1189 = vpop.f32.mrb[0].mxu0
        %v1190 = vadd.f32 0.0, %v1189
        %v1191 = vpop.f32.mrb[0].mxu0
        %1192 = vmatprep.mubr.f32.mxu0 %v1038
        %1193 = vmatmul.mubr.f32.gmra.mrb[0].mxu0 %v1037
        %v1194 = vpop.f32.mrb[0].mxu0
        %v1195 = vadd.f32 0.0, %v1194
        %v1196 = vpop.f32.mrb[0].mxu0
        %1197 = vmatprep.mubr.f32.mxu0 %v1040
        %1198 = vmatmul.mubr.f32.gmra.mrb[0].mxu0 %v1039
        %v1199 = vpop.f32.mrb[0].mxu0
        %v1200 = vadd.f32 0.0, %v1199
        %v1201 = vpop.f32.mrb[0].mxu0
        %1202 = vmatprep.mubr.f32.mxu0 %v1042
        %1203 = vmatmul.mubr.f32.gmra.mrb[0].mxu0 %v1041
        %v1204 = vpop.f32.mrb[0].mxu0
        %v1205 = vadd.f32 0.0, %v1204
        %v1206 = vpop.f32.mrb[0].mxu0
        %1207 = vmatprep.mubr.f32.mxu0 %v1044
        %1208 = vmatmul.mubr.f32.gmra.mrb[0].mxu0 %v1043
        %v1209 = vpop.f32.mrb[0].mxu0
        %v1210 = vadd.f32 0.0, %v1209
        %v1211 = vpop.f32.mrb[0].mxu0
        %1212 = vmatprep.mubr.f32.mxu0 %v1046
        %1213 = vmatmul.mubr.f32.gmra.mrb[0].mxu0 %v1045
        %v1214 = vpop.f32.mrb[0].mxu0
        %v1215 = vadd.f32 0.0, %v1214
        %v1216 = vpop.f32.mrb[0].mxu0
        %1217 = vmatprep.mubr.f32.mxu0 %v1048
        %1218 = vmatmul.mubr.f32.gmra.mrb[0].mxu0 %v1047
        %v1219 = vpop.f32.mrb[0].mxu0
        %v1220 = vadd.f32 0.0, %v1219
        %v1221 = vpop.f32.mrb[0].mxu0
        %1222 = vmatprep.mubr.f32.mxu0 %v1050
        %1223 = vmatmul.mubr.f32.gmra.mrb[0].mxu0 %v1049
        %v1224 = vpop.f32.mrb[0].mxu0
        %v1225 = vadd.f32 0.0, %v1224
        %v1226 = vpop.f32.mrb[0].mxu0
        %1227 = vdwg.mxu0
        %1228 = vst [vmem:[%s318] sm:$0xff] %v1150
        %1229 = vst [vmem:[%s318 + $0x8] sm:$0xff] %v1155
        %1230 = vst [vmem:[%s318 + $0x10] sm:$0xff] %v1160
        %1231 = vst [vmem:[%s318 + $0x18] sm:$0xff] %v1165
        %1232 = vst [vmem:[%s318 + $0x20] sm:$0xff] %v1170
        %1233 = vst [vmem:[%s318 + $0x28] sm:$0xff] %v1175
        %1234 = vst [vmem:[%s318 + $0x30] sm:$0xff] %v1180
        %1235 = vst [vmem:[%s318 + $0x38] sm:$0xff] %v1185
        %1236 = vst [vmem:[%s318 + $0x40] sm:$0xff] %v1190
        %1237 = vst [vmem:[%s318 + $0x48] sm:$0xff] %v1195
        %1238 = vst [vmem:[%s318 + $0x50] sm:$0xff] %v1200
        %1239 = vst [vmem:[%s318 + $0x58] sm:$0xff] %v1205
        %1240 = vst [vmem:[%s318 + $0x60] sm:$0xff] %v1210
        %1241 = vst [vmem:[%s318 + $0x68] sm:$0xff] %v1215
        %1242 = vst [vmem:[%s318 + $0x70] sm:$0xff] %v1220
        %1243 = vst [vmem:[%s318 + $0x78] sm:$0xff] %v1225
        %v1244 = vld [vmem:[#allocation7] sm:$0x1]
        %v1245 = vadd.f32 %v1150, %v1155
        %v1246 = vadd.f32 %v1245, %v1160
        %v1247 = vadd.f32 %v1246, %v1165
        %v1248 = vadd.f32 %v1247, %v1170
        %v1249 = vadd.f32 %v1248, %v1175
        %v1250 = vadd.f32 %v1249, %v1180
        %v1251 = vadd.f32 %v1250, %v1185
        %v1252 = vadd.f32 %v1251, %v1190
        %v1253 = vadd.f32 %v1252, %v1195
        %v1254 = vadd.f32 %v1253, %v1200
        %v1255 = vadd.f32 %v1254, %v1205
        %v1256 = vadd.f32 %v1255, %v1210
        %v1257 = vadd.f32 %v1256, %v1215
        %v1258 = vadd.f32 %v1257, %v1220
        %v1259 = vadd.f32 %v1258, %v1225
        %v1260 = vrot.slane %v1259, 4
        %v1261 = vadd.f32 %v1259, %v1260
        %v1262 = vrot.slane %v1261, 2
        %v1263 = vadd.f32 %v1261, %v1262
        %v1264 = vrot.slane %v1263, 1
        %v1265 = vadd.f32 %v1263, %v1264
        %v1266 = vadd.f32 %v1244, %v1265
        %1267 = vst [vmem:[#allocation7] sm:$0x1] %v1266
        %v1268 = vld [vmem:[#allocation9] sm:$0x1]
        %v1269 = vmul.f32 %v1150, %v1150
        %v1270 = vmul.f32 %v1155, %v1155
        %v1271 = vmul.f32 %v1160, %v1160
        %v1272 = vmul.f32 %v1165, %v1165
        %v1273 = vmul.f32 %v1170, %v1170
        %v1274 = vmul.f32 %v1175, %v1175
        %v1275 = vmul.f32 %v1180, %v1180
        %v1276 = vmul.f32 %v1185, %v1185
        %v1277 = vmul.f32 %v1190, %v1190
        %v1278 = vmul.f32 %v1195, %v1195
        %v1279 = vmul.f32 %v1200, %v1200
        %v1280 = vmul.f32 %v1205, %v1205
        %v1281 = vmul.f32 %v1210, %v1210
        %v1282 = vmul.f32 %v1215, %v1215
        %v1283 = vmul.f32 %v1220, %v1220
        %v1284 = vmul.f32 %v1225, %v1225
        %v1285 = vadd.f32 %v1269, %v1270
        %v1286 = vadd.f32 %v1285, %v1271
        %v1287 = vadd.f32 %v1286, %v1272
        %v1288 = vadd.f32 %v1287, %v1273
        %v1289 = vadd.f32 %v1288, %v1274
        %v1290 = vadd.f32 %v1289, %v1275
        %v1291 = vadd.f32 %v1290, %v1276
        %v1292 = vadd.f32 %v1291, %v1277
        %v1293 = vadd.f32 %v1292, %v1278
        %v1294 = vadd.f32 %v1293, %v1279
        %v1295 = vadd.f32 %v1294, %v1280
        %v1296 = vadd.f32 %v1295, %v1281
        %v1297 = vadd.f32 %v1296, %v1282
        %v1298 = vadd.f32 %v1297, %v1283
        %v1299 = vadd.f32 %v1298, %v1284
        %v1300 = vrot.slane %v1299, 4
        %v1301 = vadd.f32 %v1299, %v1300
        %v1302 = vrot.slane %v1301, 2
        %v1303 = vadd.f32 %v1301, %v1302
        %v1304 = vrot.slane %v1303, 1
        %v1305 = vadd.f32 %v1303, %v1304
        %v1306 = vadd.f32 %v1268, %v1305
        %1307 = vst [vmem:[#allocation9] sm:$0x1] %v1306
        %s1308 = sand.u32 %s165, 1
        %s1309 = scalar_lea.sflag [#allocation5], %s1308
        %s1310 = sand.u32 %s165, 1
        %s1311 = smul.addr %s1310, 128
        %s1312 = scalar_lea.vmem [#allocation6], %s1311
        // Predicated region
        $region53: #{tpu_custom_call.1} parent=39 // pred_check
          %p1313 = pneg %p175
        $region54: #{tpu_custom_call.1} parent=39 // pred_check_branch
          %1315 = sbr.rel (%p1313) target = $region56
        $region55: #{tpu_custom_call.1} parent=39 // pred_region
          %s1316 = smul.u32 16, %s31
          %s1318 = ssub.s32 2048, 2048
          %1319 = vsyncadd %s1309, %s1318
          %s1320 = smul.addr %s30, 32
          %s1321 = sadd.s32 %s1316, %s1320
          %s1322 = smul.addr %s1321, 128
          %s1323 = scalar_lea.hbm %s5, %s1322
          %s1324 = sshll.u32 %s1312, 4
          %s1325 = int_to_ptr.vmem [resolvable:$true] %s1324
          %1330 = dma.vmem_to_hbm [thread:$0]  %s1325, 2048, %s1323, %s1309, 128, 128, 8
        $region56: #{tpu_custom_call.1} parent=39 // pred_fallthru
          _
        // Predicated region
        $region57: #{tpu_custom_call.1} parent=39 // pred_check
          %p1331 = pneg %p196
        $region58: #{tpu_custom_call.1} parent=39 // pred_check_branch
          %1333 = sbr.rel (%p1331) target = $region60
        $region59: #{tpu_custom_call.1} parent=39 // pred_region
          %s1335 = ssub.s32 16, 16
          %1336 = vsyncadd [#allocation8], %s1335
          %s1338 = sshll.u32 [#allocation7], 4
          %s1339 = int_to_ptr.vmem [resolvable:$true] %s1338
          %1341 = dma.vmem_to_hbm [thread:$0]  %s1339, 16, %s6, [#allocation8]
        $region60: #{tpu_custom_call.1} parent=39 // pred_fallthru
          _
        // Predicated region
        $region61: #{tpu_custom_call.1} parent=39 // pred_check
          %p1342 = pneg %p217
        $region62: #{tpu_custom_call.1} parent=39 // pred_check_branch
          %1344 = sbr.rel (%p1342) target = $region64
        $region63: #{tpu_custom_call.1} parent=39 // pred_region
          %s1346 = ssub.s32 16, 16
          %1347 = vsyncadd [#allocation8], %s1346
          %s1349 = sshll.u32 [#allocation9], 4
          %s1350 = int_to_ptr.vmem [resolvable:$true] %s1349
          %1352 = dma.vmem_to_hbm [thread:$0]  %s1350, 16, %s7, [#allocation8]
        $region64: #{tpu_custom_call.1} parent=39 // pred_fallthru
          _
        // Predicated region
        $region65: #{tpu_custom_call.1} parent=39 // pred_check
          %p1353 = pneg %p196
        $region66: #{tpu_custom_call.1} parent=39 // pred_check_branch
          %1355 = sbr.rel (%p1353) target = $region68
        $region67: #{tpu_custom_call.1} parent=39 // pred_region
          %1356 = dma.done [#allocation8], 16
        $region68: #{tpu_custom_call.1} parent=39 // pred_fallthru
          _
        // Predicated region
        $region69: #{tpu_custom_call.1} parent=39 // pred_check
          %p1357 = pneg %p217
        $region70: #{tpu_custom_call.1} parent=39 // pred_check_branch
          %1359 = sbr.rel (%p1357) target = $region72
        $region71: #{tpu_custom_call.1} parent=39 // pred_region
          %1360 = dma.done [#allocation8], 16
        $region72: #{tpu_custom_call.1} parent=39 // pred_fallthru
          _
      $region40: #{tpu_custom_call.1} parent=5 // pred_fallthru
        _
      %p1361 = scmp.le.s32.totalorder 2, %s21
      // Predicated region
      $region73: #{tpu_custom_call.1} parent=5 // pred_check
        %p1362 = pneg %p1361
      $region74: #{tpu_custom_call.1} parent=5 // pred_check_branch
        %1364 = sbr.rel (%p1362) target = $region76
      $region75: #{tpu_custom_call.1} parent=5 // pred_region
        %s1365 = ssub.s32 %s21, 2
        // Predicated region
        $region77: #{tpu_custom_call.1} parent=75 // pred_check
          %p1366 = pneg %p181
        $region78: #{tpu_custom_call.1} parent=75 // pred_check_branch
          %1368 = sbr.rel (%p1366) target = $region80
        $region79: #{tpu_custom_call.1} parent=75 // pred_region
          %s1369 = sand.u32 %s166, 1
          %s1370 = scalar_lea.sflag [#allocation5], %s1369
          %s1371 = sand.u32 %s166, 1
          %s1372 = smul.addr %s1371, 128
          %s1373 = scalar_lea.vmem [#allocation6], %s1372
          %1374 = dma.done %s1370, 2048
        $region80: #{tpu_custom_call.1} parent=75 // pred_fallthru
          _
      $region76: #{tpu_custom_call.1} parent=5 // pred_fallthru
        _
    $region6: #{tpu_custom_call.1} parent=1 // loop_footer
      %s25 = sadd.s32 1, %s21
    $region7: #{tpu_custom_call.1} parent=1 // loop_footer_branch
      %20 = sbr.rel target = $region3
    $region8: #{tpu_custom_call.1} parent=1 // loop_exit
      _
    %1375 = vsyncpa [#allocation4], 1
    %s1376 = scalar_lea.sflag [#allocation4], 1
    %1377 = vsyncpa %s1376, 1
    %1378 = vsyncpa [#allocation5], 1
    %s1379 = scalar_lea.sflag [#allocation5], 1
    %1380 = vsyncpa %s1379, 1
    %1381 = vsyncpa [#allocation8], 1

</llo_original>
